<compile_context>
chip_gen: v6e
topology: v6e:2x2x1
jax: 0.10.0
libtpu: 0.0.40
codegen_flags: <defaults>
</compile_context>

<pallas_src>
import jax
import jax.numpy as jnp
from jax.experimental import pallas as pl
from jax.experimental.pallas import tpu as pltpu


# ----------------------------------------------------------------------------
# Kernel A: per (batch, row-tile) gated edge/node feature computation
#   e_tmp[b,i,j] = U_e(e)[b,i,j] + V_e(x)[b,i] + V_e(x)[b,j]
#   gate         = sigmoid(e_tmp)
#   x_tmp[b,i]   = U_n(x)[b,i] + sum_j gate[b,i,j] * V_n(x)[b,j]  (aggregation='sum')
# plus per-tile [sum(e_tmp), sum(e_tmp^2), sum(x_tmp), sum(x_tmp^2)] partials.
# ----------------------------------------------------------------------------
def _gate_kernel(x_full_ref, x_row_ref, e_ref,
                 wue_ref, bue_ref, wve_ref, bve_ref,
                 wun_ref, bun_ref, wvn_ref, bvn_ref,
                 e_tmp_ref, x_tmp_ref, stats_ref):
    _, tr, n, h = e_ref.shape

    xb = x_full_ref[0]                                   # (N, H)  all nodes of batch b
    xr = x_row_ref[0]                                    # (TR, H) nodes of this row tile

    wve = wve_ref[...]
    bve = bve_ref[...]

    # Node-side linears (hoisted, computed once per tile; bias added once).
    vx_e_all = jnp.dot(xb, wve, preferred_element_type=jnp.float32) + bve       # (N, H)
    vx_n_all = jnp.dot(xb, wvn_ref[...], preferred_element_type=jnp.float32) + bvn_ref[...]
    vx_e_row = jnp.dot(xr, wve, preferred_element_type=jnp.float32) + bve       # (TR, H)
    ux_n_row = jnp.dot(xr, wun_ref[...], preferred_element_type=jnp.float32) + bun_ref[...]

    # Edge linear: ONE big flattened matmul that fills the MXU.
    e2d = e_ref[0].reshape(tr * n, h)                                            # (TR*N, H)
    ue = jnp.dot(e2d, wue_ref[...], preferred_element_type=jnp.float32) + bue_ref[...]

    # Gated edge features + aggregation (fully vectorized, no per-row loop).
    e_tmp = ue.reshape(tr, n, h) + vx_e_row[:, None, :] + vx_e_all[None, :, :]   # (TR, N, H)
    gate = jax.nn.sigmoid(e_tmp)
    x_tmp = ux_n_row + jnp.sum(gate * vx_n_all[None, :, :], axis=1)              # (TR, H)

    e_tmp_ref[0] = e_tmp
    x_tmp_ref[0] = x_tmp

    # Partial BatchNorm statistics (per channel) for this tile.
    e_flat = e_tmp.reshape(tr * n, h)
    esum = jnp.sum(e_flat, axis=0, keepdims=True)                                # (1, H)
    esq = jnp.sum(e_flat * e_flat, axis=0, keepdims=True)
    xsum = jnp.sum(x_tmp, axis=0, keepdims=True)
    xsq = jnp.sum(x_tmp * x_tmp, axis=0, keepdims=True)
    stats_ref[0, 0] = jnp.concatenate([esum, esq, xsum, xsq], axis=0)            # (4, H)


# ----------------------------------------------------------------------------
# Kernel B: normalize (scale*x + shift) + ReLU + residual, row-tiled & lane-dense.
# ----------------------------------------------------------------------------
def _norm_relu_res_kernel(f_ref, res_ref, scale_ref, shift_ref, o_ref):
    y = f_ref[...] * scale_ref[...] + shift_ref[...]
    o_ref[...] = res_ref[...] + jnp.maximum(y, 0.0)


# ----------------------------------------------------------------------------
# Tiling helpers
# ----------------------------------------------------------------------------
def _pick_edge_row_tile(n, h, budget_bytes=2 * 1024 * 1024):
    """Largest TR (multiple of 8 or ==N) dividing N whose (TR,N,H) f32 tile fits budget."""
    row_bytes = n * h * 4
    max_tr = max(1, budget_bytes // row_bytes)
    if n <= max_tr:
        return n
    t = min((max_tr // 8) * 8, (n // 8) * 8)
    while t >= 8:
        if n % t == 0:
            return t
        t -= 8
    # TODO(synk): N with no suitable multiple-of-8 divisor falls back to full rows.
    return n


def _pick_row_tile(rows, max_rows):
    """Largest row-tile (multiple of 8 or ==rows) dividing rows, bounded by max_rows."""
    if rows <= max_rows:
        return rows
    t = (max_rows // 8) * 8
    while t >= 8:
        if rows % t == 0:
            return t
        t -= 8
    return rows  # fallback: single big block


def _bn_relu_residual(f, res, scale, shift, *, max_rows=2048):
    """out = res + relu(f*scale + shift), tiled over rows, lane-densified for small H."""
    rows, h = f.shape

    # Fold rows into lanes when H < 128 so stores are lane-dense (unmasked vst).
    k = 1
    if h < 128 and 128 % h == 0:
        k = 128 // h
        while k > 1 and rows % k != 0:
            k //= 2
    rf, hf = rows // k, h * k

    f2 = f.reshape(rf, hf)
    r2 = res.reshape(rf, hf)
    sc = jnp.tile(scale, (1, k))
    sh = jnp.tile(shift, (1, k))

    tb = _pick_row_tile(rf, max_rows)
    out = pl.pallas_call(
        _norm_relu_res_kernel,
        out_shape=jax.ShapeDtypeStruct((rf, hf), jnp.float32),
        grid=(rf // tb,),
        in_specs=[
            pl.BlockSpec((tb, hf), lambda t: (t, 0)),
            pl.BlockSpec((tb, hf), lambda t: (t, 0)),
            pl.BlockSpec((1, hf), lambda t: (0, 0)),
            pl.BlockSpec((1, hf), lambda t: (0, 0)),
        ],
        out_specs=pl.BlockSpec((tb, hf), lambda t: (t, 0)),
        input_output_aliases={0: 0},   # write result in place of f (e_tmp / x_tmp)
        compiler_params=pltpu.CompilerParams(
            dimension_semantics=("parallel",),
            vmem_limit_bytes=32 * 1024 * 1024),
    )(f2, r2, sc, sh)
    return out.reshape(rows, h)


# ----------------------------------------------------------------------------
# Wrapper
# ----------------------------------------------------------------------------
def residual_gated_gcn_layer(x, e, params):
    (wue, bue, wve, bve, wun, bun, wvn, bvn,
     gamma_e, beta_e, gamma_n, beta_n) = params
    B, N, H = x.shape

    TR = _pick_edge_row_tile(N, H)
    NT = N // TR

    wspec = pl.BlockSpec((H, H), lambda b, r: (0, 0))
    bspec = pl.BlockSpec((1, H), lambda b, r: (0, 0))

    e_tmp, x_tmp, stats = pl.pallas_call(
        _gate_kernel,
        out_shape=(jax.ShapeDtypeStruct((B, N, N, H), jnp.float32),
                   jax.ShapeDtypeStruct((B, N, H), jnp.float32),
                   jax.ShapeDtypeStruct((B, NT, 4, H), jnp.float32)),
        grid=(B, NT),
        in_specs=[
            pl.BlockSpec((1, N, H), lambda b, r: (b, 0, 0)),         # x, all rows of batch b
            pl.BlockSpec((1, TR, H), lambda b, r: (b, r, 0)),        # x, tile rows
            pl.BlockSpec((1, TR, N, H), lambda b, r: (b, r, 0, 0)),  # e, row tile
            wspec, bspec, wspec, bspec, wspec, bspec, wspec, bspec,
        ],
        out_specs=(
            pl.BlockSpec((1, TR, N, H), lambda b, r: (b, r, 0, 0)),
            pl.BlockSpec((1, TR, H), lambda b, r: (b, r, 0)),
            pl.BlockSpec((1, 1, 4, H), lambda b, r: (b, r, 0, 0)),
        ),
        compiler_params=pltpu.CompilerParams(
            dimension_semantics=("parallel", "parallel"),
            vmem_limit_bytes=32 * 1024 * 1024),
    )(x, x, e, wue, bue, wve, bve, wun, bun, wvn, bvn)

    # Global BatchNorm statistics from the per-tile partials (tiny reduction).
    s = jnp.sum(stats, axis=(0, 1))                      # (4, H)
    e_cnt = float(B * N * N)
    n_cnt = float(B * N)
    e_mean = s[0] / e_cnt
    e_var = jnp.maximum(s[1] / e_cnt - e_mean * e_mean, 0.0)
    x_mean = s[2] / n_cnt
    x_var = jnp.maximum(s[3] / n_cnt - x_mean * x_mean, 0.0)

    e_scale = gamma_e * jax.lax.rsqrt(e_var + 1e-5)      # (1, H)
    e_shift = beta_e - e_mean * e_scale
    x_scale = gamma_n * jax.lax.rsqrt(x_var + 1e-5)
    x_shift = beta_n - x_mean * x_scale

    # BatchNormEdge / BatchNormNode + ReLU + residual (tiled, mem-bound epilogue).
    e_new = _bn_relu_residual(e_tmp.reshape(B * N * N, H),
                              e.reshape(B * N * N, H), e_scale, e_shift)
    x_new = _bn_relu_residual(x_tmp.reshape(B * N, H),
                              x.reshape(B * N, H), x_scale, x_shift)

    return x_new.reshape(B, N, H), e_new.reshape(B, N, N, H)


# ----------------------------------------------------------------------------
# Pure-JAX reference (mirrors the PyTorch forward exactly)
# ----------------------------------------------------------------------------
def _reference(x, e, params):
    (wue, bue, wve, bve, wun, bun, wvn, bvn,
     gamma_e, beta_e, gamma_n, beta_n) = params
    ue = e @ wue + bue[0]
    vx = x @ wve + bve[0]
    e_tmp = ue + vx[:, :, None, :] + vx[:, None, :, :]
    gate = jax.nn.sigmoid(e_tmp)
    ux = x @ wun + bun[0]
    vnx = x @ wvn + bvn[0]
    x_tmp = ux + jnp.sum(gate * vnx[:, None, :, :], axis=2)   # aggregation='sum'

    def batchnorm(f, gamma, beta):
        axes = tuple(range(f.ndim - 1))
        mean = f.mean(axis=axes, keepdims=True)
        var = ((f - mean) ** 2).mean(axis=axes, keepdims=True)
        return (f - mean) / jnp.sqrt(var + 1e-5) * gamma[0] + beta[0]

    e_new = e + jnp.maximum(batchnorm(e_tmp, gamma_e, beta_e), 0.0)
    x_new = x + jnp.maximum(batchnorm(x_tmp, gamma_n, beta_n), 0.0)
    return x_new, e_new


# ----------------------------------------------------------------------------
# Deterministic parameter init + example run
# ----------------------------------------------------------------------------
def _make_params(key, hidden_dim):
    ks = jax.random.split(key, 8)
    scale = 1.0 / jnp.sqrt(hidden_dim)

    def w(k):
        return jax.random.normal(k, (hidden_dim, hidden_dim), jnp.float32) * scale

    def b(k):
        return jax.random.normal(k, (1, hidden_dim), jnp.float32) * 0.01

    wue, bue = w(ks[0]), b(ks[1])   # EdgeFeatures.U
    wve, bve = w(ks[2]), b(ks[3])   # EdgeFeatures.V
    wun, bun = w(ks[4]), b(ks[5])   # NodeFeatures.U
    wvn, bvn = w(ks[6]), b(ks[7])   # NodeFeatures.V
    gamma_e = jnp.ones((1, hidden_dim), jnp.float32)   # BatchNorm2d affine init
    beta_e = jnp.zeros((1, hidden_dim), jnp.float32)
    gamma_n = jnp.ones((1, hidden_dim), jnp.float32)   # BatchNorm1d affine init
    beta_n = jnp.zeros((1, hidden_dim), jnp.float32)
    return (wue, bue, wve, bve, wun, bun, wvn, bvn,
            gamma_e, beta_e, gamma_n, beta_n)


if __name__ == "__main__":
    B, N, H = 2, 8, 32
    key = jax.random.PRNGKey(0)
    kx, ke, kp = jax.random.split(key, 3)
    x = jax.random.normal(kx, (B, N, H), jnp.float32)
    e = jax.random.normal(ke, (B, N, N, H), jnp.float32)
    params = _make_params(kp, H)

    layer = jax.jit(residual_gated_gcn_layer)
    x_new, e_new = jax.block_until_ready(layer(x, e, params))

    x_ref, e_ref = _reference(x, e, params)
    assert jnp.allclose(x_new, x_ref, atol=1e-4, rtol=1e-4), "node output mismatch"
    assert jnp.allclose(e_new, e_ref, atol=1e-4, rtol=1e-4), "edge output mismatch"

    print("KERNEL_OK")
</pallas_src>

<mosaic_0001>
module attributes {stable_mosaic.version = 11 : i64} {
  func.func @_gate_kernel(%arg0: i32, %arg1: i32, %arg2: memref<1x8x32xf32, #tpu.memory_space<vmem>>, %arg3: memref<1x8x32xf32, #tpu.memory_space<vmem>>, %arg4: memref<1x8x8x32xf32, #tpu.memory_space<vmem>>, %arg5: memref<32x32xf32, #tpu.memory_space<vmem>>, %arg6: memref<1x32xf32, #tpu.memory_space<vmem>>, %arg7: memref<32x32xf32, #tpu.memory_space<vmem>>, %arg8: memref<1x32xf32, #tpu.memory_space<vmem>>, %arg9: memref<32x32xf32, #tpu.memory_space<vmem>>, %arg10: memref<1x32xf32, #tpu.memory_space<vmem>>, %arg11: memref<32x32xf32, #tpu.memory_space<vmem>>, %arg12: memref<1x32xf32, #tpu.memory_space<vmem>>, %arg13: memref<1x8x8x32xf32, #tpu.memory_space<vmem>>, %arg14: memref<1x8x32xf32, #tpu.memory_space<vmem>>, %arg15: memref<1x1x4x32xf32, #tpu.memory_space<vmem>>) attributes {dimension_semantics = [#tpu.dimension_semantics<parallel>, #tpu.dimension_semantics<parallel>], iteration_bounds = array<i64: 2, 1>, scalar_prefetch = 0 : i64, scratch_operands = 0 : i64, tpu.core_type = #tpu.core_type<tc>, window_params = [{transform_indices = @transform_0, window_bounds = array<i64: 1, 8, 32>}, {transform_indices = @transform_1, window_bounds = array<i64: 1, 8, 32>}, {transform_indices = @transform_2, window_bounds = array<i64: 1, 8, 8, 32>}, {pipeline_mode = #tpu.pipeline_mode<synchronous>, transform_indices = @transform_3, window_bounds = array<i64: 32, 32>}, {pipeline_mode = #tpu.pipeline_mode<synchronous>, transform_indices = @transform_4, window_bounds = array<i64: 1, 32>}, {pipeline_mode = #tpu.pipeline_mode<synchronous>, transform_indices = @transform_5, window_bounds = array<i64: 32, 32>}, {pipeline_mode = #tpu.pipeline_mode<synchronous>, transform_indices = @transform_6, window_bounds = array<i64: 1, 32>}, {pipeline_mode = #tpu.pipeline_mode<synchronous>, transform_indices = @transform_7, window_bounds = array<i64: 32, 32>}, {pipeline_mode = #tpu.pipeline_mode<synchronous>, transform_indices = @transform_8, window_bounds = array<i64: 1, 32>}, {pipeline_mode = #tpu.pipeline_mode<synchronous>, transform_indices = @transform_9, window_bounds = array<i64: 32, 32>}, {pipeline_mode = #tpu.pipeline_mode<synchronous>, transform_indices = @transform_10, window_bounds = array<i64: 1, 32>}, {transform_indices = @transform_11, window_bounds = array<i64: 1, 8, 8, 32>}, {transform_indices = @transform_12, window_bounds = array<i64: 1, 8, 32>}, {transform_indices = @transform_13, window_bounds = array<i64: 1, 1, 4, 32>}]} {
    %c0 = arith.constant 0 : index
    %c0_0 = arith.constant 0 : index
    %c0_1 = arith.constant 0 : index
    %0 = vector.load %arg2[%c0, %c0_0, %c0_1] : memref<1x8x32xf32, #tpu.memory_space<vmem>>, vector<1x8x32xf32>
    %1 = vector.shape_cast %0 : vector<1x8x32xf32> to vector<8x32xf32>
    %c0_2 = arith.constant 0 : index
    %c0_3 = arith.constant 0 : index
    %c0_4 = arith.constant 0 : index
    %2 = vector.load %arg3[%c0_2, %c0_3, %c0_4] : memref<1x8x32xf32, #tpu.memory_space<vmem>>, vector<1x8x32xf32>
    %3 = vector.shape_cast %2 : vector<1x8x32xf32> to vector<8x32xf32>
    %c0_5 = arith.constant 0 : index
    %c0_6 = arith.constant 0 : index
    %4 = vector.load %arg7[%c0_5, %c0_6] : memref<32x32xf32, #tpu.memory_space<vmem>>, vector<32x32xf32>
    %c0_7 = arith.constant 0 : index
    %c0_8 = arith.constant 0 : index
    %5 = vector.load %arg8[%c0_7, %c0_8] : memref<1x32xf32, #tpu.memory_space<vmem>>, vector<1x32xf32>
    %cst = arith.constant dense<0.000000e+00> : vector<8x32xf32>
    %6 = tpu.matmul %1, %4, %cst {dimension_numbers = #tpu.dot_dimension_numbers<[1], [0], [0], [1], [0, 0, 1, 1], [], []>} : vector<8x32xf32>, vector<32x32xf32>, vector<8x32xf32> -> vector<8x32xf32>
    %7 = vector.broadcast %5 : vector<1x32xf32> to vector<8x32xf32>
    %8 = arith.addf %6, %7 : vector<8x32xf32>
    %c0_9 = arith.constant 0 : index
    %c0_10 = arith.constant 0 : index
    %9 = vector.load %arg11[%c0_9, %c0_10] : memref<32x32xf32, #tpu.memory_space<vmem>>, vector<32x32xf32>
    %cst_11 = arith.constant dense<0.000000e+00> : vector<8x32xf32>
    %10 = tpu.matmul %1, %9, %cst_11 {dimension_numbers = #tpu.dot_dimension_numbers<[1], [0], [0], [1], [0, 0, 1, 1], [], []>} : vector<8x32xf32>, vector<32x32xf32>, vector<8x32xf32> -> vector<8x32xf32>
    %c0_12 = arith.constant 0 : index
    %c0_13 = arith.constant 0 : index
    %11 = vector.load %arg12[%c0_12, %c0_13] : memref<1x32xf32, #tpu.memory_space<vmem>>, vector<1x32xf32>
    %12 = vector.broadcast %11 : vector<1x32xf32> to vector<8x32xf32>
    %13 = arith.addf %10, %12 : vector<8x32xf32>
    %cst_14 = arith.constant dense<0.000000e+00> : vector<8x32xf32>
    %14 = tpu.matmul %3, %4, %cst_14 {dimension_numbers = #tpu.dot_dimension_numbers<[1], [0], [0], [1], [0, 0, 1, 1], [], []>} : vector<8x32xf32>, vector<32x32xf32>, vector<8x32xf32> -> vector<8x32xf32>
    %15 = vector.broadcast %5 : vector<1x32xf32> to vector<8x32xf32>
    %16 = arith.addf %14, %15 : vector<8x32xf32>
    %c0_15 = arith.constant 0 : index
    %c0_16 = arith.constant 0 : index
    %17 = vector.load %arg9[%c0_15, %c0_16] : memref<32x32xf32, #tpu.memory_space<vmem>>, vector<32x32xf32>
    %cst_17 = arith.constant dense<0.000000e+00> : vector<8x32xf32>
    %18 = tpu.matmul %3, %17, %cst_17 {dimension_numbers = #tpu.dot_dimension_numbers<[1], [0], [0], [1], [0, 0, 1, 1], [], []>} : vector<8x32xf32>, vector<32x32xf32>, vector<8x32xf32> -> vector<8x32xf32>
    %c0_18 = arith.constant 0 : index
    %c0_19 = arith.constant 0 : index
    %19 = vector.load %arg10[%c0_18, %c0_19] : memref<1x32xf32, #tpu.memory_space<vmem>>, vector<1x32xf32>
    %20 = vector.broadcast %19 : vector<1x32xf32> to vector<8x32xf32>
    %21 = arith.addf %18, %20 : vector<8x32xf32>
    %c0_20 = arith.constant 0 : index
    %c0_21 = arith.constant 0 : index
    %c0_22 = arith.constant 0 : index
    %c0_23 = arith.constant 0 : index
    %22 = vector.load %arg4[%c0_20, %c0_21, %c0_22, %c0_23] : memref<1x8x8x32xf32, #tpu.memory_space<vmem>>, vector<1x8x8x32xf32>
    %23 = vector.shape_cast %22 : vector<1x8x8x32xf32> to vector<8x8x32xf32>
    %24 = vector.shape_cast %23 : vector<8x8x32xf32> to vector<64x32xf32>
    %c0_24 = arith.constant 0 : index
    %c0_25 = arith.constant 0 : index
    %25 = vector.load %arg5[%c0_24, %c0_25] : memref<32x32xf32, #tpu.memory_space<vmem>>, vector<32x32xf32>
    %cst_26 = arith.constant dense<0.000000e+00> : vector<64x32xf32>
    %26 = tpu.matmul %24, %25, %cst_26 {dimension_numbers = #tpu.dot_dimension_numbers<[1], [0], [0], [1], [0, 0, 1, 1], [], []>} : vector<64x32xf32>, vector<32x32xf32>, vector<64x32xf32> -> vector<64x32xf32>
    %c0_27 = arith.constant 0 : index
    %c0_28 = arith.constant 0 : index
    %27 = vector.load %arg6[%c0_27, %c0_28] : memref<1x32xf32, #tpu.memory_space<vmem>>, vector<1x32xf32>
    %28 = vector.broadcast %27 : vector<1x32xf32> to vector<64x32xf32>
    %29 = arith.addf %26, %28 : vector<64x32xf32>
    %30 = vector.shape_cast %29 : vector<64x32xf32> to vector<8x8x32xf32>
    %31 = vector.shape_cast %16 : vector<8x32xf32> to vector<8x1x32xf32>
    %32 = vector.broadcast %31 : vector<8x1x32xf32> to vector<8x8x32xf32>
    %33 = arith.addf %30, %32 : vector<8x8x32xf32>
    %34 = vector.shape_cast %8 : vector<8x32xf32> to vector<1x8x32xf32>
    %35 = vector.broadcast %34 : vector<1x8x32xf32> to vector<8x8x32xf32>
    %36 = arith.addf %33, %35 : vector<8x8x32xf32>
    %37 = arith.negf %36 : vector<8x8x32xf32>
    %38 = math.exp %37 : vector<8x8x32xf32>
    %cst_29 = arith.constant 1.000000e+00 : f32
    %39 = vector.broadcast %cst_29 : f32 to vector<8x8x32xf32>
    %40 = arith.addf %39, %38 : vector<8x8x32xf32>
    %41 = arith.divf %39, %40 : vector<8x8x32xf32>
    %42 = vector.shape_cast %13 : vector<8x32xf32> to vector<1x8x32xf32>
    %43 = vector.broadcast %42 : vector<1x8x32xf32> to vector<8x8x32xf32>
    %44 = arith.mulf %41, %43 : vector<8x8x32xf32>
    %cst_30 = arith.constant dense<0.000000e+00> : vector<8x32xf32>
    %45 = vector.multi_reduction <add>, %44, %cst_30 [1] : vector<8x8x32xf32> to vector<8x32xf32>
    %46 = arith.addf %21, %45 : vector<8x32xf32>
    %c0_31 = arith.constant 0 : index
    %c0_32 = arith.constant 0 : index
    %c0_33 = arith.constant 0 : index
    %c0_34 = arith.constant 0 : index
    %47 = vector.load %arg13[%c0_31, %c0_32, %c0_33, %c0_34] : memref<1x8x8x32xf32, #tpu.memory_space<vmem>>, vector<1x8x8x32xf32>
    %48 = vector.shape_cast %47 : vector<1x8x8x32xf32> to vector<8x8x32xf32>
    %49 = vector.shape_cast %36 : vector<8x8x32xf32> to vector<1x8x8x32xf32>
    tpu.vector_store %arg13[%c0_31, %c0_32, %c0_33, %c0_34], %49 {strides = array<i32>} : memref<1x8x8x32xf32, #tpu.memory_space<vmem>>, vector<1x8x8x32xf32>,
    %c0_35 = arith.constant 0 : index
    %c0_36 = arith.constant 0 : index
    %c0_37 = arith.constant 0 : index
    %50 = vector.load %arg14[%c0_35, %c0_36, %c0_37] : memref<1x8x32xf32, #tpu.memory_space<vmem>>, vector<1x8x32xf32>
    %51 = vector.shape_cast %50 : vector<1x8x32xf32> to vector<8x32xf32>
    %52 = vector.shape_cast %46 : vector<8x32xf32> to vector<1x8x32xf32>
    tpu.vector_store %arg14[%c0_35, %c0_36, %c0_37], %52 {strides = array<i32>} : memref<1x8x32xf32, #tpu.memory_space<vmem>>, vector<1x8x32xf32>,
    %53 = vector.shape_cast %36 : vector<8x8x32xf32> to vector<64x32xf32>
    %cst_38 = arith.constant dense<0.000000e+00> : vector<32xf32>
    %54 = vector.multi_reduction <add>, %53, %cst_38 [0] : vector<64x32xf32> to vector<32xf32>
    %55 = vector.shape_cast %54 : vector<32xf32> to vector<1x32xf32>
    %56 = arith.mulf %53, %53 : vector<64x32xf32>
    %cst_39 = arith.constant dense<0.000000e+00> : vector<32xf32>
    %57 = vector.multi_reduction <add>, %56, %cst_39 [0] : vector<64x32xf32> to vector<32xf32>
    %58 = vector.shape_cast %57 : vector<32xf32> to vector<1x32xf32>
    %cst_40 = arith.constant dense<0.000000e+00> : vector<32xf32>
    %59 = vector.multi_reduction <add>, %46, %cst_40 [0] : vector<8x32xf32> to vector<32xf32>
    %60 = vector.shape_cast %59 : vector<32xf32> to vector<1x32xf32>
    %61 = arith.mulf %46, %46 : vector<8x32xf32>
    %cst_41 = arith.constant dense<0.000000e+00> : vector<32xf32>
    %62 = vector.multi_reduction <add>, %61, %cst_41 [0] : vector<8x32xf32> to vector<32xf32>
    %63 = vector.shape_cast %62 : vector<32xf32> to vector<1x32xf32>
    %64 = tpu.concatenate %55, %58, %60, %63 in 0 : vector<1x32xf32>, vector<1x32xf32>, vector<1x32xf32>, vector<1x32xf32> -> vector<4x32xf32>
    %c0_42 = arith.constant 0 : index
    %c0_43 = arith.constant 0 : index
    %c0_44 = arith.constant 0 : index
    %c0_45 = arith.constant 0 : index
    %65 = vector.load %arg15[%c0_42, %c0_43, %c0_44, %c0_45] : memref<1x1x4x32xf32, #tpu.memory_space<vmem>>, vector<1x1x4x32xf32>
    %66 = vector.shape_cast %65 : vector<1x1x4x32xf32> to vector<4x32xf32>
    %67 = vector.shape_cast %64 : vector<4x32xf32> to vector<1x1x4x32xf32>
    tpu.vector_store %arg15[%c0_42, %c0_43, %c0_44, %c0_45], %67 {strides = array<i32>} : memref<1x1x4x32xf32, #tpu.memory_space<vmem>>, vector<1x1x4x32xf32>,
    return
  }
  func.func @transform_0(%arg0: i32, %arg1: i32) -> (i32, i32, i32) {
    %c0_i32 = arith.constant 0 : i32
    %c0_i32_0 = arith.constant 0 : i32
    %c0_i32_1 = arith.constant 0 : i32
    return %arg0, %c0_i32, %c0_i32_0 : i32, i32, i32
  }
  func.func @transform_1(%arg0: i32, %arg1: i32) -> (i32, i32, i32) {
    %c0_i32 = arith.constant 0 : i32
    %c0_i32_0 = arith.constant 0 : i32
    return %arg0, %arg1, %c0_i32 : i32, i32, i32
  }
  func.func @transform_2(%arg0: i32, %arg1: i32) -> (i32, i32, i32, i32) {
    %c0_i32 = arith.constant 0 : i32
    %c0_i32_0 = arith.constant 0 : i32
    %c0_i32_1 = arith.constant 0 : i32
    return %arg0, %arg1, %c0_i32, %c0_i32_0 : i32, i32, i32, i32
  }
  func.func @transform_3(%arg0: i32, %arg1: i32) -> (i32, i32) {
    %c0_i32 = arith.constant 0 : i32
    %c0_i32_0 = arith.constant 0 : i32
    %c0_i32_1 = arith.constant 0 : i32
    return %c0_i32, %c0_i32_0 : i32, i32
  }
  func.func @transform_4(%arg0: i32, %arg1: i32) -> (i32, i32) {
    %c0_i32 = arith.constant 0 : i32
    %c0_i32_0 = arith.constant 0 : i32
    %c0_i32_1 = arith.constant 0 : i32
    return %c0_i32, %c0_i32_0 : i32, i32
  }
  func.func @transform_5(%arg0: i32, %arg1: i32) -> (i32, i32) {
    %c0_i32 = arith.constant 0 : i32
    %c0_i32_0 = arith.constant 0 : i32
    %c0_i32_1 = arith.constant 0 : i32
    return %c0_i32, %c0_i32_0 : i32, i32
  }
  func.func @transform_6(%arg0: i32, %arg1: i32) -> (i32, i32) {
    %c0_i32 = arith.constant 0 : i32
    %c0_i32_0 = arith.constant 0 : i32
    %c0_i32_1 = arith.constant 0 : i32
    return %c0_i32, %c0_i32_0 : i32, i32
  }
  func.func @transform_7(%arg0: i32, %arg1: i32) -> (i32, i32) {
    %c0_i32 = arith.constant 0 : i32
    %c0_i32_0 = arith.constant 0 : i32
    %c0_i32_1 = arith.constant 0 : i32
    return %c0_i32, %c0_i32_0 : i32, i32
  }
  func.func @transform_8(%arg0: i32, %arg1: i32) -> (i32, i32) {
    %c0_i32 = arith.constant 0 : i32
    %c0_i32_0 = arith.constant 0 : i32
    %c0_i32_1 = arith.constant 0 : i32
    return %c0_i32, %c0_i32_0 : i32, i32
  }
  func.func @transform_9(%arg0: i32, %arg1: i32) -> (i32, i32) {
    %c0_i32 = arith.constant 0 : i32
    %c0_i32_0 = arith.constant 0 : i32
    %c0_i32_1 = arith.constant 0 : i32
    return %c0_i32, %c0_i32_0 : i32, i32
  }
  func.func @transform_10(%arg0: i32, %arg1: i32) -> (i32, i32) {
    %c0_i32 = arith.constant 0 : i32
    %c0_i32_0 = arith.constant 0 : i32
    %c0_i32_1 = arith.constant 0 : i32
    return %c0_i32, %c0_i32_0 : i32, i32
  }
  func.func @transform_11(%arg0: i32, %arg1: i32) -> (i32, i32, i32, i32) {
    %c0_i32 = arith.constant 0 : i32
    %c0_i32_0 = arith.constant 0 : i32
    %c0_i32_1 = arith.constant 0 : i32
    return %arg0, %arg1, %c0_i32, %c0_i32_0 : i32, i32, i32, i32
  }
  func.func @transform_12(%arg0: i32, %arg1: i32) -> (i32, i32, i32) {
    %c0_i32 = arith.constant 0 : i32
    %c0_i32_0 = arith.constant 0 : i32
    return %arg0, %arg1, %c0_i32 : i32, i32, i32
  }
  func.func @transform_13(%arg0: i32, %arg1: i32) -> (i32, i32, i32, i32) {
    %c0_i32 = arith.constant 0 : i32
    %c0_i32_0 = arith.constant 0 : i32
    %c0_i32_1 = arith.constant 0 : i32
    return %arg0, %arg1, %c0_i32, %c0_i32_0 : i32, i32, i32, i32
  }
}

module attributes {stable_mosaic.version = 11 : i64} {
  func.func @_norm_relu_res_kernel(%arg0: i32, %arg1: memref<32x128xf32, #tpu.memory_space<vmem>>, %arg2: memref<32x128xf32, #tpu.memory_space<vmem>>, %arg3: memref<1x128xf32, #tpu.memory_space<vmem>>, %arg4: memref<1x128xf32, #tpu.memory_space<vmem>>, %arg5: memref<32x128xf32, #tpu.memory_space<vmem>>) attributes {dimension_semantics = [#tpu.dimension_semantics<parallel>], iteration_bounds = array<i64: 1>, scalar_prefetch = 0 : i64, scratch_operands = 0 : i64, tpu.core_type = #tpu.core_type<tc>, window_params = [{transform_indices = @transform_0, window_bounds = array<i64: 32, 128>}, {transform_indices = @transform_1, window_bounds = array<i64: 32, 128>}, {pipeline_mode = #tpu.pipeline_mode<synchronous>, transform_indices = @transform_2, window_bounds = array<i64: 1, 128>}, {pipeline_mode = #tpu.pipeline_mode<synchronous>, transform_indices = @transform_3, window_bounds = array<i64: 1, 128>}, {transform_indices = @transform_4, window_bounds = array<i64: 32, 128>}]} {
    %c0 = arith.constant 0 : index
    %c0_0 = arith.constant 0 : index
    %0 = vector.load %arg1[%c0, %c0_0] : memref<32x128xf32, #tpu.memory_space<vmem>>, vector<32x128xf32>
    %c0_1 = arith.constant 0 : index
    %c0_2 = arith.constant 0 : index
    %1 = vector.load %arg3[%c0_1, %c0_2] : memref<1x128xf32, #tpu.memory_space<vmem>>, vector<1x128xf32>
    %2 = vector.broadcast %1 : vector<1x128xf32> to vector<32x128xf32>
    %3 = arith.mulf %0, %2 : vector<32x128xf32>
    %c0_3 = arith.constant 0 : index
    %c0_4 = arith.constant 0 : index
    %4 = vector.load %arg4[%c0_3, %c0_4] : memref<1x128xf32, #tpu.memory_space<vmem>>, vector<1x128xf32>
    %5 = vector.broadcast %4 : vector<1x128xf32> to vector<32x128xf32>
    %6 = arith.addf %3, %5 : vector<32x128xf32>
    %c0_5 = arith.constant 0 : index
    %c0_6 = arith.constant 0 : index
    %7 = vector.load %arg2[%c0_5, %c0_6] : memref<32x128xf32, #tpu.memory_space<vmem>>, vector<32x128xf32>
    %cst = arith.constant 0.000000e+00 : f32
    %8 = vector.broadcast %cst : f32 to vector<32x128xf32>
    %9 = arith.maximumf %6, %8 : vector<32x128xf32>
    %10 = arith.addf %7, %9 : vector<32x128xf32>
    %c0_7 = arith.constant 0 : index
    %c0_8 = arith.constant 0 : index
    %11 = vector.load %arg5[%c0_7, %c0_8] : memref<32x128xf32, #tpu.memory_space<vmem>>, vector<32x128xf32>
    tpu.vector_store %arg5[%c0_7, %c0_8], %10 {strides = array<i32>} : memref<32x128xf32, #tpu.memory_space<vmem>>, vector<32x128xf32>,
    return
  }
  func.func @transform_0(%arg0: i32) -> (i32, i32) {
    %c0_i32 = arith.constant 0 : i32
    %c0_i32_0 = arith.constant 0 : i32
    return %arg0, %c0_i32 : i32, i32
  }
  func.func @transform_1(%arg0: i32) -> (i32, i32) {
    %c0_i32 = arith.constant 0 : i32
    %c0_i32_0 = arith.constant 0 : i32
    return %arg0, %c0_i32 : i32, i32
  }
  func.func @transform_2(%arg0: i32) -> (i32, i32) {
    %c0_i32 = arith.constant 0 : i32
    %c0_i32_0 = arith.constant 0 : i32
    %c0_i32_1 = arith.constant 0 : i32
    return %c0_i32, %c0_i32_0 : i32, i32
  }
  func.func @transform_3(%arg0: i32) -> (i32, i32) {
    %c0_i32 = arith.constant 0 : i32
    %c0_i32_0 = arith.constant 0 : i32
    %c0_i32_1 = arith.constant 0 : i32
    return %c0_i32, %c0_i32_0 : i32, i32
  }
  func.func @transform_4(%arg0: i32) -> (i32, i32) {
    %c0_i32 = arith.constant 0 : i32
    %c0_i32_0 = arith.constant 0 : i32
    return %arg0, %c0_i32 : i32, i32
  }
}

module attributes {stable_mosaic.version = 11 : i64} {
  func.func @_norm_relu_res_kernel(%arg0: i32, %arg1: memref<4x128xf32, #tpu.memory_space<vmem>>, %arg2: memref<4x128xf32, #tpu.memory_space<vmem>>, %arg3: memref<1x128xf32, #tpu.memory_space<vmem>>, %arg4: memref<1x128xf32, #tpu.memory_space<vmem>>, %arg5: memref<4x128xf32, #tpu.memory_space<vmem>>) attributes {dimension_semantics = [#tpu.dimension_semantics<parallel>], iteration_bounds = array<i64: 1>, scalar_prefetch = 0 : i64, scratch_operands = 0 : i64, tpu.core_type = #tpu.core_type<tc>, window_params = [{transform_indices = @transform_0, window_bounds = array<i64: 4, 128>}, {transform_indices = @transform_1, window_bounds = array<i64: 4, 128>}, {pipeline_mode = #tpu.pipeline_mode<synchronous>, transform_indices = @transform_2, window_bounds = array<i64: 1, 128>}, {pipeline_mode = #tpu.pipeline_mode<synchronous>, transform_indices = @transform_3, window_bounds = array<i64: 1, 128>}, {transform_indices = @transform_4, window_bounds = array<i64: 4, 128>}]} {
    %c0 = arith.constant 0 : index
    %c0_0 = arith.constant 0 : index
    %0 = vector.load %arg1[%c0, %c0_0] : memref<4x128xf32, #tpu.memory_space<vmem>>, vector<4x128xf32>
    %c0_1 = arith.constant 0 : index
    %c0_2 = arith.constant 0 : index
    %1 = vector.load %arg3[%c0_1, %c0_2] : memref<1x128xf32, #tpu.memory_space<vmem>>, vector<1x128xf32>
    %2 = vector.broadcast %1 : vector<1x128xf32> to vector<4x128xf32>
    %3 = arith.mulf %0, %2 : vector<4x128xf32>
    %c0_3 = arith.constant 0 : index
    %c0_4 = arith.constant 0 : index
    %4 = vector.load %arg4[%c0_3, %c0_4] : memref<1x128xf32, #tpu.memory_space<vmem>>, vector<1x128xf32>
    %5 = vector.broadcast %4 : vector<1x128xf32> to vector<4x128xf32>
    %6 = arith.addf %3, %5 : vector<4x128xf32>
    %c0_5 = arith.constant 0 : index
    %c0_6 = arith.constant 0 : index
    %7 = vector.load %arg2[%c0_5, %c0_6] : memref<4x128xf32, #tpu.memory_space<vmem>>, vector<4x128xf32>
    %cst = arith.constant 0.000000e+00 : f32
    %8 = vector.broadcast %cst : f32 to vector<4x128xf32>
    %9 = arith.maximumf %6, %8 : vector<4x128xf32>
    %10 = arith.addf %7, %9 : vector<4x128xf32>
    %c0_7 = arith.constant 0 : index
    %c0_8 = arith.constant 0 : index
    %11 = vector.load %arg5[%c0_7, %c0_8] : memref<4x128xf32, #tpu.memory_space<vmem>>, vector<4x128xf32>
    tpu.vector_store %arg5[%c0_7, %c0_8], %10 {strides = array<i32>} : memref<4x128xf32, #tpu.memory_space<vmem>>, vector<4x128xf32>,
    return
  }
  func.func @transform_0(%arg0: i32) -> (i32, i32) {
    %c0_i32 = arith.constant 0 : i32
    %c0_i32_0 = arith.constant 0 : i32
    return %arg0, %c0_i32 : i32, i32
  }
  func.func @transform_1(%arg0: i32) -> (i32, i32) {
    %c0_i32 = arith.constant 0 : i32
    %c0_i32_0 = arith.constant 0 : i32
    return %arg0, %c0_i32 : i32, i32
  }
  func.func @transform_2(%arg0: i32) -> (i32, i32) {
    %c0_i32 = arith.constant 0 : i32
    %c0_i32_0 = arith.constant 0 : i32
    %c0_i32_1 = arith.constant 0 : i32
    return %c0_i32, %c0_i32_0 : i32, i32
  }
  func.func @transform_3(%arg0: i32) -> (i32, i32) {
    %c0_i32 = arith.constant 0 : i32
    %c0_i32_0 = arith.constant 0 : i32
    %c0_i32_1 = arith.constant 0 : i32
    return %c0_i32, %c0_i32_0 : i32, i32
  }
  func.func @transform_4(%arg0: i32) -> (i32, i32) {
    %c0_i32 = arith.constant 0 : i32
    %c0_i32_0 = arith.constant 0 : i32
    return %arg0, %c0_i32 : i32, i32
  }
}

</mosaic_0001>

<llo_original>
// kernel: residual_gated_gcn_layer.4
$region0: #{residual_gated_gcn_layer.4}
  #allocation0 [shape = 'u32[]', space=smem, size = 0x4, offset = 0x4, fixed_abs, tag = 'smem constant byte address 0x4 - core index']
  #allocation1 [shape = 'u32[144,128]{1,0:T(1,128)}', space=vmem, size = 0x12000, scoped, tag = 'internal scratch']
  %s0 = inlined_call_operand.vmem [shape: f32[32,128], index: 0, kind: input, shape index: {}, may-alias: {0,4}]
  %s1 = inlined_call_operand.vmem [shape: f32[32,128], index: 1, kind: input, shape index: {}]
  %s2 = inlined_call_operand.vmem [shape: f32[1,128], index: 2, kind: input, shape index: {}]
  %s3 = inlined_call_operand.vmem [shape: f32[1,128], index: 3, kind: input, shape index: {}]
  %s4 = inlined_call_operand.vmem [shape: f32[32,128], index: 4, kind: output, shape index: {}, may-alias: {0,4}]
  %s5 = sld [smem:[#allocation0]]
  $region26: #{residual_gated_gcn_layer.4} parent=0
    _
  %s7 = ssub.s32 1, %s5
  %s8 = scalar_select 0, %s7, %s5
  // Predicated region
  $region2: #{residual_gated_gcn_layer.4} parent=0 // pred_check
    _
  $region3: #{residual_gated_gcn_layer.4} parent=0 // pred_check_branch
    %10 = sbr.rel (0) target = $region5
  $region4: #{residual_gated_gcn_layer.4} parent=0 // pred_region
    _
  $region5: #{residual_gated_gcn_layer.4} parent=0 // pred_fallthru
    _
  // Predicated region
  $region6: #{residual_gated_gcn_layer.4} parent=0 // pred_check
    _
  $region7: #{residual_gated_gcn_layer.4} parent=0 // pred_check_branch
    %12 = sbr.rel (0) target = $region9
  $region8: #{residual_gated_gcn_layer.4} parent=0 // pred_region
    _
  $region9: #{residual_gated_gcn_layer.4} parent=0 // pred_fallthru
    _
  // Predicated region
  $region10: #{residual_gated_gcn_layer.4} parent=0 // pred_check
    _
  $region11: #{residual_gated_gcn_layer.4} parent=0 // pred_check_branch
    %14 = sbr.rel (0) target = $region13
  $region12: #{residual_gated_gcn_layer.4} parent=0 // pred_region
    _
  $region13: #{residual_gated_gcn_layer.4} parent=0 // pred_fallthru
    _
  // Predicated region
  $region14: #{residual_gated_gcn_layer.4} parent=0 // pred_check
    _
  $region15: #{residual_gated_gcn_layer.4} parent=0 // pred_check_branch
    %16 = sbr.rel (0) target = $region17
  $region16: #{residual_gated_gcn_layer.4} parent=0 // pred_region
    _
  $region17: #{residual_gated_gcn_layer.4} parent=0 // pred_fallthru
    _
  %v17 = vld [vmem:[%s0] sm:$0xff]
  %v18 = vld [vmem:[%s0 + $0x8] sm:$0xff]
  %v19 = vld [vmem:[%s0 + $0x10] sm:$0xff]
  %v20 = vld [vmem:[%s0 + $0x18] sm:$0xff]
  %v21 = vld [vmem:[%s2] sm:$0x1]
  %v23 = vlaneseq
  %v24 = vshrl.u32 %v23, 7
  %v25 = vsub.s32 0, %v24
  %v26 = vrot.slane %v21, %v25
  %v28 = vmul.f32 %v17, %v26
  %v29 = vmul.f32 %v18, %v26
  %v30 = vmul.f32 %v19, %v26
  %v31 = vmul.f32 %v20, %v26
  %v32 = vld [vmem:[%s3] sm:$0x1]
  %v34 = vlaneseq
  %v35 = vshrl.u32 %v34, 7
  %v36 = vsub.s32 0, %v35
  %v37 = vrot.slane %v32, %v36
  %v39 = vadd.f32 %v28, %v37
  %v40 = vadd.f32 %v29, %v37
  %v41 = vadd.f32 %v30, %v37
  %v42 = vadd.f32 %v31, %v37
  %v43 = vld [vmem:[%s1] sm:$0xff]
  %v44 = vld [vmem:[%s1 + $0x8] sm:$0xff]
  %v45 = vld [vmem:[%s1 + $0x10] sm:$0xff]
  %v46 = vld [vmem:[%s1 + $0x18] sm:$0xff]
  %v47 = vmax.f32 %v39, 0.0
  %v48 = vmax.f32 %v40, 0.0
  %v49 = vmax.f32 %v41, 0.0
  %v50 = vmax.f32 %v42, 0.0
  %v51 = vadd.f32 %v43, %v47
  %v52 = vadd.f32 %v44, %v48
  %v53 = vadd.f32 %v45, %v49
  %v54 = vadd.f32 %v46, %v50
  %55 = vst [vmem:[%s4] sm:$0xff] %v51
  %56 = vst [vmem:[%s4 + $0x8] sm:$0xff] %v52
  %57 = vst [vmem:[%s4 + $0x10] sm:$0xff] %v53
  %58 = vst [vmem:[%s4 + $0x18] sm:$0xff] %v54
  // Predicated region
  $region18: #{residual_gated_gcn_layer.4} parent=0 // pred_check
    _
  $region19: #{residual_gated_gcn_layer.4} parent=0 // pred_check_branch
    %60 = sbr.rel (0) target = $region21
  $region20: #{residual_gated_gcn_layer.4} parent=0 // pred_region
    _
  $region21: #{residual_gated_gcn_layer.4} parent=0 // pred_fallthru
    _
  // Predicated region
  $region22: #{residual_gated_gcn_layer.4} parent=0 // pred_check
    _
  $region23: #{residual_gated_gcn_layer.4} parent=0 // pred_check_branch
    %62 = sbr.rel (0) target = $region25
  $region24: #{residual_gated_gcn_layer.4} parent=0 // pred_region
    _
  $region25: #{residual_gated_gcn_layer.4} parent=0 // pred_fallthru
    _

// kernel: residual_gated_gcn_layer.5
$region0: #{residual_gated_gcn_layer.5}
  #allocation0 [shape = 'u32[]', space=smem, size = 0x4, offset = 0x4, fixed_abs, tag = 'smem constant byte address 0x4 - core index']
  #allocation1 [shape = 'u32[144,128]{1,0:T(1,128)}', space=vmem, size = 0x12000, scoped, tag = 'internal scratch']
  %s0 = inlined_call_operand.vmem [shape: f32[4,128], index: 0, kind: input, shape index: {}, may-alias: {0,4}]
  %s1 = inlined_call_operand.vmem [shape: f32[4,128], index: 1, kind: input, shape index: {}]
  %s2 = inlined_call_operand.vmem [shape: f32[1,128], index: 2, kind: input, shape index: {}]
  %s3 = inlined_call_operand.vmem [shape: f32[1,128], index: 3, kind: input, shape index: {}]
  %s4 = inlined_call_operand.vmem [shape: f32[4,128], index: 4, kind: output, shape index: {}, may-alias: {0,4}]
  %s5 = sld [smem:[#allocation0]]
  $region26: #{residual_gated_gcn_layer.5} parent=0
    _
  %s7 = ssub.s32 1, %s5
  %s8 = scalar_select 0, %s7, %s5
  // Predicated region
  $region2: #{residual_gated_gcn_layer.5} parent=0 // pred_check
    _
  $region3: #{residual_gated_gcn_layer.5} parent=0 // pred_check_branch
    %10 = sbr.rel (0) target = $region5
  $region4: #{residual_gated_gcn_layer.5} parent=0 // pred_region
    _
  $region5: #{residual_gated_gcn_layer.5} parent=0 // pred_fallthru
    _
  // Predicated region
  $region6: #{residual_gated_gcn_layer.5} parent=0 // pred_check
    _
  $region7: #{residual_gated_gcn_layer.5} parent=0 // pred_check_branch
    %12 = sbr.rel (0) target = $region9
  $region8: #{residual_gated_gcn_layer.5} parent=0 // pred_region
    _
  $region9: #{residual_gated_gcn_layer.5} parent=0 // pred_fallthru
    _
  // Predicated region
  $region10: #{residual_gated_gcn_layer.5} parent=0 // pred_check
    _
  $region11: #{residual_gated_gcn_layer.5} parent=0 // pred_check_branch
    %14 = sbr.rel (0) target = $region13
  $region12: #{residual_gated_gcn_layer.5} parent=0 // pred_region
    _
  $region13: #{residual_gated_gcn_layer.5} parent=0 // pred_fallthru
    _
  // Predicated region
  $region14: #{residual_gated_gcn_layer.5} parent=0 // pred_check
    _
  $region15: #{residual_gated_gcn_layer.5} parent=0 // pred_check_branch
    %16 = sbr.rel (0) target = $region17
  $region16: #{residual_gated_gcn_layer.5} parent=0 // pred_region
    _
  $region17: #{residual_gated_gcn_layer.5} parent=0 // pred_fallthru
    _
  %v17 = vld [vmem:[%s0] sm:$0xf]
  %v18 = vld [vmem:[%s2] sm:$0x1]
  %v20 = vlaneseq
  %v21 = vshrl.u32 %v20, 7
  %v22 = vsub.s32 0, %v21
  %v23 = vrot.slane %v18, %v22
  %v25 = vmul.f32 %v17, %v23
  %v26 = vld [vmem:[%s3] sm:$0x1]
  %v28 = vlaneseq
  %v29 = vshrl.u32 %v28, 7
  %v30 = vsub.s32 0, %v29
  %v31 = vrot.slane %v26, %v30
  %v33 = vadd.f32 %v25, %v31
  %v34 = vld [vmem:[%s1] sm:$0xf]
  %v35 = vmax.f32 %v33, 0.0
  %v36 = vadd.f32 %v34, %v35
  %37 = vst [vmem:[%s4] sm:$0xf] %v36
  // Predicated region
  $region18: #{residual_gated_gcn_layer.5} parent=0 // pred_check
    _
  $region19: #{residual_gated_gcn_layer.5} parent=0 // pred_check_branch
    %39 = sbr.rel (0) target = $region21
  $region20: #{residual_gated_gcn_layer.5} parent=0 // pred_region
    _
  $region21: #{residual_gated_gcn_layer.5} parent=0 // pred_fallthru
    _
  // Predicated region
  $region22: #{residual_gated_gcn_layer.5} parent=0 // pred_check
    _
  $region23: #{residual_gated_gcn_layer.5} parent=0 // pred_check_branch
    %41 = sbr.rel (0) target = $region25
  $region24: #{residual_gated_gcn_layer.5} parent=0 // pred_region
    _
  $region25: #{residual_gated_gcn_layer.5} parent=0 // pred_fallthru
    _

// kernel: residual_gated_gcn_layer.3
$region0: #{residual_gated_gcn_layer.3}
  #allocation0 [shape = 'u32[]', space=smem, size = 0x4, offset = 0x4, fixed_abs, tag = 'smem constant byte address 0x4 - core index']
  #allocation1 [shape = 'u32[144,128]{1,0:T(1,128)}', space=vmem, size = 0x12000, scoped, tag = 'internal scratch']
  %s0 = inlined_call_operand.vmem [shape: f32[2,8,32], index: 0, kind: input, shape index: {}, may-alias: {0,1}]
  %s1 = inlined_call_operand.vmem [shape: f32[2,8,32], index: 1, kind: input, shape index: {}, may-alias: {0,1}]
  %s2 = inlined_call_operand.hbm [shape: f32[2,8,8,32], index: 2, kind: input, shape index: {}]
  %s3 = inlined_call_operand.hbm [shape: f32[32,32], index: 3, kind: input, shape index: {}]
  %s4 = inlined_call_operand.vmem [shape: f32[1,32], index: 4, kind: input, shape index: {}]
  %s5 = inlined_call_operand.hbm [shape: f32[32,32], index: 5, kind: input, shape index: {}]
  %s6 = inlined_call_operand.vmem [shape: f32[1,32], index: 6, kind: input, shape index: {}]
  %s7 = inlined_call_operand.hbm [shape: f32[32,32], index: 7, kind: input, shape index: {}]
  %s8 = inlined_call_operand.vmem [shape: f32[1,32], index: 8, kind: input, shape index: {}]
  %s9 = inlined_call_operand.hbm [shape: f32[32,32], index: 9, kind: input, shape index: {}]
  %s10 = inlined_call_operand.vmem [shape: f32[1,32], index: 10, kind: input, shape index: {}]
  %s11 = inlined_call_operand.vmem [shape: f32[2,8,8,32], index: 11, kind: output, shape index: {0}]
  %s12 = inlined_call_operand.vmem [shape: f32[2,8,32], index: 12, kind: output, shape index: {1}]
  %s13 = inlined_call_operand.vmem [shape: f32[2,1,4,32], index: 13, kind: output, shape index: {2}]
  %14 = xla_tuple %s11, %s12, %s13
  %s15 = sld [smem:[#allocation0]]
  $region113: #{residual_gated_gcn_layer.3} parent=0
    _
  %s17 = ssub.s32 1, %s15
  %s18 = scalar_select 0, %s17, %s15
  $region1: #{residual_gated_gcn_layer.3} parent=0
    #allocation2 [shape = 'u8[65536]{0}', space=vmem, size = 0x10000, scoped, tag = 'input window, operand 2']
    #allocation3 [shape = 's32[2]{0}', space=sflag, size = 0x8, scoped, tag = 'scoped memory for residual_gated_gcn_layer.3']
    #allocation4 [shape = 'u8[16384]{0}', space=vmem, size = 0x4000, scoped, tag = 'input window, operand 3, single buffered']
    #allocation5 [shape = 's32[1]{0}', space=sflag, size = 0x4, scoped, tag = 'scoped memory for residual_gated_gcn_layer.3']
    #allocation6 [shape = 'u8[16384]{0}', space=vmem, size = 0x4000, scoped, tag = 'input window, operand 5, single buffered']
    #allocation7 [shape = 'u8[16384]{0}', space=vmem, size = 0x4000, scoped, tag = 'input window, operand 7, single buffered']
    #allocation8 [shape = 's32[1]{0}', space=sflag, size = 0x4, scoped, tag = 'scoped memory for residual_gated_gcn_layer.3']
    #allocation9 [shape = 'u8[16384]{0}', space=vmem, size = 0x4000, scoped, tag = 'input window, operand 9, single buffered']
    %19 = vsyncpa [#allocation3], 0
    %s20 = scalar_lea.sflag [#allocation3], 1
    %21 = vsyncpa %s20, 0
    %22 = vsyncpa [#allocation5], 0
    %23 = vsyncpa [#allocation8], 0
    loop: start=0, step=1, limit=4
    $region2: #{residual_gated_gcn_layer.3} parent=1 // loop_pre_header
      _
    $region3: #{residual_gated_gcn_layer.3} parent=1 // loop_header
      %s25 = sphi 0, %s29
      %p26 = scmp.ge.s32.totalorder %s25, 4
      %s32 = sphi 0, %s44
      %s33 = sphi 0, %s40
      %s34 = sphi 0, %s32
      %s35 = sphi 0, %s33
      %s36 = sphi 0, %s34
      %s37 = sphi 0, %s35
      %s47 = sphi 0, %s49
      %s50 = sphi 0, %s47
      %s51 = sphi 0, %s50
      %s67 = sphi 0, %s51
      %s75 = sphi 0, %s77
      %s78 = sphi 0, %s75
      %s79 = sphi 0, %s78
      %s95 = sphi 0, %s79
      %s103 = sphi 0, %s105
      %s106 = sphi 0, %s103
      %s107 = sphi 0, %s106
      %s123 = sphi 0, %s107
      %s127 = sphi 0, %s127
      %s129 = sphi 0, %s127
      %s130 = sphi 0, %s129
      %s144 = sphi 0, %s130
      %s148 = sphi 0, %s148
      %s150 = sphi 0, %s148
      %s151 = sphi 0, %s150
      %s165 = sphi 0, %s151
      %s169 = sphi 0, %s169
      %s171 = sphi 0, %s169
      %s172 = sphi 0, %s171
      %s186 = sphi 0, %s172
      %s190 = sphi 0, %s190
      %s192 = sphi 0, %s190
      %s193 = sphi 0, %s192
      %s207 = sphi 0, %s193
      %s211 = sphi 0, %s211
      %s213 = sphi 0, %s211
      %s214 = sphi 0, %s213
      %s228 = sphi 0, %s214
      %s232 = sphi 0, %s232
      %s234 = sphi 0, %s232
      %s235 = sphi 0, %s234
      %s249 = sphi 0, %s235
      %s253 = sphi 0, %s253
      %s255 = sphi 0, %s253
      %s256 = sphi 0, %s255
      %s270 = sphi 0, %s256
      %s274 = sphi 0, %s274
      %s276 = sphi 0, %s274
      %s277 = sphi 0, %s276
      %s291 = sphi 0, %s277
      %s299 = sphi 0, %s301
      %s302 = sphi 0, %s299
      %s303 = sphi 0, %s302
      %s319 = sphi 0, %s303
      %s327 = sphi 0, %s329
      %s330 = sphi 0, %s327
      %s331 = sphi 0, %s330
      %s347 = sphi 0, %s331
      %s355 = sphi 0, %s357
      %s358 = sphi 0, %s355
      %s359 = sphi 0, %s358
      %s375 = sphi 0, %s359
    $region4: #{residual_gated_gcn_layer.3} parent=1 // loop_header_branch
      %28 = sbr.rel (%p26) target = $region8
    $region5: #{residual_gated_gcn_layer.3} parent=1 // loop_body
      %s30 = ssub.s32 %s25, 1
      %s31 = ssub.s32 %s25, 2
      %s38 = sadd.s32 1, %s33
      %p39 = scmp.ge.s32.totalorder %s38, 1
      %s40 = scalar_select %p39, 0, %s38
      %s41 = sadd.s32 1, %s32
      %s42 = scalar_select %p39, %s41, %s32
      %p43 = scmp.ge.s32.totalorder %s42, 2
      %s44 = scalar_select %p43, 0, %s42
      %s45 = ssub.s32 %s32, %s44
      %p46 = scmp.eq.s32.totalorder %s45, 0
      %s48 = sadd.s32 %s47, 1
      %s49 = scalar_select %p46, %s47, %s48
      %p52 = pneg %p46
      %p53 = scmp.eq.s32.totalorder %s25, 1
      %p54 = por %p52, %p53
      %p55 = scmp.ne.s32.totalorder %s47, %s50
      %p56 = scmp.eq.s32.totalorder %s25, 0
      %p57 = por %p55, %p56
      %p58 = scmp.ne.s32.totalorder %s47, %s50
      %p59 = scmp.eq.s32.totalorder %s30, 1
      %p60 = por %p58, %p59
      %p61 = scmp.ne.s32.totalorder %s50, %s51
      %p62 = scmp.eq.s32.totalorder %s30, 0
      %p63 = por %p61, %p62
      %p64 = scmp.ne.s32.totalorder %s50, %s51
      %p65 = scmp.eq.s32.totalorder %s31, 1
      %p66 = por %p64, %p65
      %p68 = scmp.ne.s32.totalorder %s51, %s67
      %p69 = scmp.eq.s32.totalorder %s31, 0
      %p70 = por %p68, %p69
      %s71 = ssub.s32 %s32, %s44
      %s72 = ssub.s32 %s33, %s40
      %s73 = sor.u32 %s71, %s72
      %p74 = scmp.eq.s32.totalorder %s73, 0
      %s76 = sadd.s32 %s75, 1
      %s77 = scalar_select %p74, %s75, %s76
      %p80 = pneg %p74
      %p81 = scmp.eq.s32.totalorder %s25, 1
      %p82 = por %p80, %p81
      %p83 = scmp.ne.s32.totalorder %s75, %s78
      %p84 = scmp.eq.s32.totalorder %s25, 0
      %p85 = por %p83, %p84
      %p86 = scmp.ne.s32.totalorder %s75, %s78
      %p87 = scmp.eq.s32.totalorder %s30, 1
      %p88 = por %p86, %p87
      %p89 = scmp.ne.s32.totalorder %s78, %s79
      %p90 = scmp.eq.s32.totalorder %s30, 0
      %p91 = por %p89, %p90
      %p92 = scmp.ne.s32.totalorder %s78, %s79
      %p93 = scmp.eq.s32.totalorder %s31, 1
      %p94 = por %p92, %p93
      %p96 = scmp.ne.s32.totalorder %s79, %s95
      %p97 = scmp.eq.s32.totalorder %s31, 0
      %p98 = por %p96, %p97
      %s99 = ssub.s32 %s32, %s44
      %s100 = ssub.s32 %s33, %s40
      %s101 = sor.u32 %s99, %s100
      %p102 = scmp.eq.s32.totalorder %s101, 0
      %s104 = sadd.s32 %s103, 1
      %s105 = scalar_select %p102, %s103, %s104
      %p108 = pneg %p102
      %p109 = scmp.eq.s32.totalorder %s25, 1
      %p110 = por %p108, %p109
      %p111 = scmp.ne.s32.totalorder %s103, %s106
      %p112 = scmp.eq.s32.totalorder %s25, 0
      %p113 = por %p111, %p112
      %p114 = scmp.ne.s32.totalorder %s103, %s106
      %p115 = scmp.eq.s32.totalorder %s30, 1
      %p116 = por %p114, %p115
      %p117 = scmp.ne.s32.totalorder %s106, %s107
      %p118 = scmp.eq.s32.totalorder %s30, 0
      %p119 = por %p117, %p118
      %p120 = scmp.ne.s32.totalorder %s106, %s107
      %p121 = scmp.eq.s32.totalorder %s31, 1
      %p122 = por %p120, %p121
      %p124 = scmp.ne.s32.totalorder %s107, %s123
      %p125 = scmp.eq.s32.totalorder %s31, 0
      %p126 = por %p124, %p125
      %s128 = sadd.s32 %s127, 1
      %p131 = scmp.eq.s32.totalorder %s25, 1
      %p132 = scmp.ne.s32.totalorder %s127, %s129
      %p133 = scmp.eq.s32.totalorder %s25, 0
      %p134 = por %p132, %p133
      %p135 = scmp.ne.s32.totalorder %s127, %s129
      %p136 = scmp.eq.s32.totalorder %s30, 1
      %p137 = por %p135, %p136
      %p138 = scmp.ne.s32.totalorder %s129, %s130
      %p139 = scmp.eq.s32.totalorder %s30, 0
      %p140 = por %p138, %p139
      %p141 = scmp.ne.s32.totalorder %s129, %s130
      %p142 = scmp.eq.s32.totalorder %s31, 1
      %p143 = por %p141, %p142
      %p145 = scmp.ne.s32.totalorder %s130, %s144
      %p146 = scmp.eq.s32.totalorder %s31, 0
      %p147 = por %p145, %p146
      %s149 = sadd.s32 %s148, 1
      %p152 = scmp.eq.s32.totalorder %s25, 1
      %p153 = scmp.ne.s32.totalorder %s148, %s150
      %p154 = scmp.eq.s32.totalorder %s25, 0
      %p155 = por %p153, %p154
      %p156 = scmp.ne.s32.totalorder %s148, %s150
      %p157 = scmp.eq.s32.totalorder %s30, 1
      %p158 = por %p156, %p157
      %p159 = scmp.ne.s32.totalorder %s150, %s151
      %p160 = scmp.eq.s32.totalorder %s30, 0
      %p161 = por %p159, %p160
      %p162 = scmp.ne.s32.totalorder %s150, %s151
      %p163 = scmp.eq.s32.totalorder %s31, 1
      %p164 = por %p162, %p163
      %p166 = scmp.ne.s32.totalorder %s151, %s165
      %p167 = scmp.eq.s32.totalorder %s31, 0
      %p168 = por %p166, %p167
      %s170 = sadd.s32 %s169, 1
      %p173 = scmp.eq.s32.totalorder %s25, 1
      %p174 = scmp.ne.s32.totalorder %s169, %s171
      %p175 = scmp.eq.s32.totalorder %s25, 0
      %p176 = por %p174, %p175
      %p177 = scmp.ne.s32.totalorder %s169, %s171
      %p178 = scmp.eq.s32.totalorder %s30, 1
      %p179 = por %p177, %p178
      %p180 = scmp.ne.s32.totalorder %s171, %s172
      %p181 = scmp.eq.s32.totalorder %s30, 0
      %p182 = por %p180, %p181
      %p183 = scmp.ne.s32.totalorder %s171, %s172
      %p184 = scmp.eq.s32.totalorder %s31, 1
      %p185 = por %p183, %p184
      %p187 = scmp.ne.s32.totalorder %s172, %s186
      %p188 = scmp.eq.s32.totalorder %s31, 0
      %p189 = por %p187, %p188
      %s191 = sadd.s32 %s190, 1
      %p194 = scmp.eq.s32.totalorder %s25, 1
      %p195 = scmp.ne.s32.totalorder %s190, %s192
      %p196 = scmp.eq.s32.totalorder %s25, 0
      %p197 = por %p195, %p196
      %p198 = scmp.ne.s32.totalorder %s190, %s192
      %p199 = scmp.eq.s32.totalorder %s30, 1
      %p200 = por %p198, %p199
      %p201 = scmp.ne.s32.totalorder %s192, %s193
      %p202 = scmp.eq.s32.totalorder %s30, 0
      %p203 = por %p201, %p202
      %p204 = scmp.ne.s32.totalorder %s192, %s193
      %p205 = scmp.eq.s32.totalorder %s31, 1
      %p206 = por %p204, %p205
      %p208 = scmp.ne.s32.totalorder %s193, %s207
      %p209 = scmp.eq.s32.totalorder %s31, 0
      %p210 = por %p208, %p209
      %s212 = sadd.s32 %s211, 1
      %p215 = scmp.eq.s32.totalorder %s25, 1
      %p216 = scmp.ne.s32.totalorder %s211, %s213
      %p217 = scmp.eq.s32.totalorder %s25, 0
      %p218 = por %p216, %p217
      %p219 = scmp.ne.s32.totalorder %s211, %s213
      %p220 = scmp.eq.s32.totalorder %s30, 1
      %p221 = por %p219, %p220
      %p222 = scmp.ne.s32.totalorder %s213, %s214
      %p223 = scmp.eq.s32.totalorder %s30, 0
      %p224 = por %p222, %p223
      %p225 = scmp.ne.s32.totalorder %s213, %s214
      %p226 = scmp.eq.s32.totalorder %s31, 1
      %p227 = por %p225, %p226
      %p229 = scmp.ne.s32.totalorder %s214, %s228
      %p230 = scmp.eq.s32.totalorder %s31, 0
      %p231 = por %p229, %p230
      %s233 = sadd.s32 %s232, 1
      %p236 = scmp.eq.s32.totalorder %s25, 1
      %p237 = scmp.ne.s32.totalorder %s232, %s234
      %p238 = scmp.eq.s32.totalorder %s25, 0
      %p239 = por %p237, %p238
      %p240 = scmp.ne.s32.totalorder %s232, %s234
      %p241 = scmp.eq.s32.totalorder %s30, 1
      %p242 = por %p240, %p241
      %p243 = scmp.ne.s32.totalorder %s234, %s235
      %p244 = scmp.eq.s32.totalorder %s30, 0
      %p245 = por %p243, %p244
      %p246 = scmp.ne.s32.totalorder %s234, %s235
      %p247 = scmp.eq.s32.totalorder %s31, 1
      %p248 = por %p246, %p247
      %p250 = scmp.ne.s32.totalorder %s235, %s249
      %p251 = scmp.eq.s32.totalorder %s31, 0
      %p252 = por %p250, %p251
      %s254 = sadd.s32 %s253, 1
      %p257 = scmp.eq.s32.totalorder %s25, 1
      %p258 = scmp.ne.s32.totalorder %s253, %s255
      %p259 = scmp.eq.s32.totalorder %s25, 0
      %p260 = por %p258, %p259
      %p261 = scmp.ne.s32.totalorder %s253, %s255
      %p262 = scmp.eq.s32.totalorder %s30, 1
      %p263 = por %p261, %p262
      %p264 = scmp.ne.s32.totalorder %s255, %s256
      %p265 = scmp.eq.s32.totalorder %s30, 0
      %p266 = por %p264, %p265
      %p267 = scmp.ne.s32.totalorder %s255, %s256
      %p268 = scmp.eq.s32.totalorder %s31, 1
      %p269 = por %p267, %p268
      %p271 = scmp.ne.s32.totalorder %s256, %s270
      %p272 = scmp.eq.s32.totalorder %s31, 0
      %p273 = por %p271, %p272
      %s275 = sadd.s32 %s274, 1
      %p278 = scmp.eq.s32.totalorder %s25, 1
      %p279 = scmp.ne.s32.totalorder %s274, %s276
      %p280 = scmp.eq.s32.totalorder %s25, 0
      %p281 = por %p279, %p280
      %p282 = scmp.ne.s32.totalorder %s274, %s276
      %p283 = scmp.eq.s32.totalorder %s30, 1
      %p284 = por %p282, %p283
      %p285 = scmp.ne.s32.totalorder %s276, %s277
      %p286 = scmp.eq.s32.totalorder %s30, 0
      %p287 = por %p285, %p286
      %p288 = scmp.ne.s32.totalorder %s276, %s277
      %p289 = scmp.eq.s32.totalorder %s31, 1
      %p290 = por %p288, %p289
      %p292 = scmp.ne.s32.totalorder %s277, %s291
      %p293 = scmp.eq.s32.totalorder %s31, 0
      %p294 = por %p292, %p293
      %s295 = ssub.s32 %s32, %s44
      %s296 = ssub.s32 %s33, %s40
      %s297 = sor.u32 %s295, %s296
      %p298 = scmp.eq.s32.totalorder %s297, 0
      %s300 = sadd.s32 %s299, 1
      %s301 = scalar_select %p298, %s299, %s300
      %p304 = pneg %p298
      %p305 = scmp.eq.s32.totalorder %s25, 1
      %p306 = por %p304, %p305
      %p307 = scmp.ne.s32.totalorder %s299, %s302
      %p308 = scmp.eq.s32.totalorder %s25, 0
      %p309 = por %p307, %p308
      %p310 = scmp.ne.s32.totalorder %s299, %s302
      %p311 = scmp.eq.s32.totalorder %s30, 1
      %p312 = por %p310, %p311
      %p313 = scmp.ne.s32.totalorder %s302, %s303
      %p314 = scmp.eq.s32.totalorder %s30, 0
      %p315 = por %p313, %p314
      %p316 = scmp.ne.s32.totalorder %s302, %s303
      %p317 = scmp.eq.s32.totalorder %s31, 1
      %p318 = por %p316, %p317
      %p320 = scmp.ne.s32.totalorder %s303, %s319
      %p321 = scmp.eq.s32.totalorder %s31, 0
      %p322 = por %p320, %p321
      %s323 = ssub.s32 %s32, %s44
      %s324 = ssub.s32 %s33, %s40
      %s325 = sor.u32 %s323, %s324
      %p326 = scmp.eq.s32.totalorder %s325, 0
      %s328 = sadd.s32 %s327, 1
      %s329 = scalar_select %p326, %s327, %s328
      %p332 = pneg %p326
      %p333 = scmp.eq.s32.totalorder %s25, 1
      %p334 = por %p332, %p333
      %p335 = scmp.ne.s32.totalorder %s327, %s330
      %p336 = scmp.eq.s32.totalorder %s25, 0
      %p337 = por %p335, %p336
      %p338 = scmp.ne.s32.totalorder %s327, %s330
      %p339 = scmp.eq.s32.totalorder %s30, 1
      %p340 = por %p338, %p339
      %p341 = scmp.ne.s32.totalorder %s330, %s331
      %p342 = scmp.eq.s32.totalorder %s30, 0
      %p343 = por %p341, %p342
      %p344 = scmp.ne.s32.totalorder %s330, %s331
      %p345 = scmp.eq.s32.totalorder %s31, 1
      %p346 = por %p344, %p345
      %p348 = scmp.ne.s32.totalorder %s331, %s347
      %p349 = scmp.eq.s32.totalorder %s31, 0
      %p350 = por %p348, %p349
      %s351 = ssub.s32 %s32, %s44
      %s352 = ssub.s32 %s33, %s40
      %s353 = sor.u32 %s351, %s352
      %p354 = scmp.eq.s32.totalorder %s353, 0
      %s356 = sadd.s32 %s355, 1
      %s357 = scalar_select %p354, %s355, %s356
      %p360 = pneg %p354
      %p361 = scmp.eq.s32.totalorder %s25, 1
      %p362 = por %p360, %p361
      %p363 = scmp.ne.s32.totalorder %s355, %s358
      %p364 = scmp.eq.s32.totalorder %s25, 0
      %p365 = por %p363, %p364
      %p366 = scmp.ne.s32.totalorder %s355, %s358
      %p367 = scmp.eq.s32.totalorder %s30, 1
      %p368 = por %p366, %p367
      %p369 = scmp.ne.s32.totalorder %s358, %s359
      %p370 = scmp.eq.s32.totalorder %s30, 0
      %p371 = por %p369, %p370
      %p372 = scmp.ne.s32.totalorder %s358, %s359
      %p373 = scmp.eq.s32.totalorder %s31, 1
      %p374 = por %p372, %p373
      %p376 = scmp.ne.s32.totalorder %s359, %s375
      %p377 = scmp.eq.s32.totalorder %s31, 0
      %p378 = por %p376, %p377
      %p379 = scmp.le.s32.totalorder 1, %s25
      %p380 = scmp.lt.s32.totalorder %s25, 3
      %p381 = pnand %p379, %p380
      %p382 = pneg %p381
      // Predicated region
      $region9: #{residual_gated_gcn_layer.3} parent=5 // pred_check
        _
      $region10: #{residual_gated_gcn_layer.3} parent=5 // pred_check_branch
        %384 = sbr.rel (%p381) target = $region12
      $region11: #{residual_gated_gcn_layer.3} parent=5 // pred_region
        %s385 = ssub.s32 %s25, 1
        // Predicated region
        $region13: #{residual_gated_gcn_layer.3} parent=11 // pred_check
          %p386 = pneg %p140
        $region14: #{residual_gated_gcn_layer.3} parent=11 // pred_check_branch
          %388 = sbr.rel (%p386) target = $region16
        $region15: #{residual_gated_gcn_layer.3} parent=11 // pred_region
          %s390 = ssub.s32 512, 512
          %391 = vsyncadd [#allocation5], %s390
          %s392 = sshll.u32 [#allocation4], 4
          %s393 = int_to_ptr.vmem [resolvable:$true] %s392
          %398 = dma.hbm_to_vmem [thread:$0]  %s3, 512, %s393, [#allocation5], 128, 128, 8
        $region16: #{residual_gated_gcn_layer.3} parent=11 // pred_fallthru
          _
        // Predicated region
        $region17: #{residual_gated_gcn_layer.3} parent=11 // pred_check
          %p399 = pneg %p161
        $region18: #{residual_gated_gcn_layer.3} parent=11 // pred_check_branch
          %401 = sbr.rel (%p399) target = $region20
        $region19: #{residual_gated_gcn_layer.3} parent=11 // pred_region
          _
        $region20: #{residual_gated_gcn_layer.3} parent=11 // pred_fallthru
          _
        // Predicated region
        $region21: #{residual_gated_gcn_layer.3} parent=11 // pred_check
          %p402 = pneg %p182
        $region22: #{residual_gated_gcn_layer.3} parent=11 // pred_check_branch
          %404 = sbr.rel (%p402) target = $region24
        $region23: #{residual_gated_gcn_layer.3} parent=11 // pred_region
          %s406 = ssub.s32 512, 512
          %407 = vsyncadd [#allocation5], %s406
          %s408 = sshll.u32 [#allocation6], 4
          %s409 = int_to_ptr.vmem [resolvable:$true] %s408
          %414 = dma.hbm_to_vmem [thread:$0]  %s5, 512, %s409, [#allocation5], 128, 128, 8
        $region24: #{residual_gated_gcn_layer.3} parent=11 // pred_fallthru
          _
        // Predicated region
        $region25: #{residual_gated_gcn_layer.3} parent=11 // pred_check
          %p415 = pneg %p203
        $region26: #{residual_gated_gcn_layer.3} parent=11 // pred_check_branch
          %417 = sbr.rel (%p415) target = $region28
        $region27: #{residual_gated_gcn_layer.3} parent=11 // pred_region
          _
        $region28: #{residual_gated_gcn_layer.3} parent=11 // pred_fallthru
          _
        // Predicated region
        $region29: #{residual_gated_gcn_layer.3} parent=11 // pred_check
          %p418 = pneg %p224
        $region30: #{residual_gated_gcn_layer.3} parent=11 // pred_check_branch
          %420 = sbr.rel (%p418) target = $region32
        $region31: #{residual_gated_gcn_layer.3} parent=11 // pred_region
          %s422 = ssub.s32 512, 512
          %423 = vsyncadd [#allocation8], %s422
          %s424 = sshll.u32 [#allocation7], 4
          %s425 = int_to_ptr.vmem [resolvable:$true] %s424
          %430 = dma.hbm_to_vmem [thread:$0]  %s7, 512, %s425, [#allocation8], 128, 128, 8
        $region32: #{residual_gated_gcn_layer.3} parent=11 // pred_fallthru
          _
        // Predicated region
        $region33: #{residual_gated_gcn_layer.3} parent=11 // pred_check
          %p431 = pneg %p245
        $region34: #{residual_gated_gcn_layer.3} parent=11 // pred_check_branch
          %433 = sbr.rel (%p431) target = $region36
        $region35: #{residual_gated_gcn_layer.3} parent=11 // pred_region
          _
        $region36: #{residual_gated_gcn_layer.3} parent=11 // pred_fallthru
          _
        // Predicated region
        $region37: #{residual_gated_gcn_layer.3} parent=11 // pred_check
          %p434 = pneg %p266
        $region38: #{residual_gated_gcn_layer.3} parent=11 // pred_check_branch
          %436 = sbr.rel (%p434) target = $region40
        $region39: #{residual_gated_gcn_layer.3} parent=11 // pred_region
          %s438 = ssub.s32 512, 512
          %439 = vsyncadd [#allocation8], %s438
          %s440 = sshll.u32 [#allocation9], 4
          %s441 = int_to_ptr.vmem [resolvable:$true] %s440
          %446 = dma.hbm_to_vmem [thread:$0]  %s9, 512, %s441, [#allocation8], 128, 128, 8
        $region40: #{residual_gated_gcn_layer.3} parent=11 // pred_fallthru
          _
        // Predicated region
        $region41: #{residual_gated_gcn_layer.3} parent=11 // pred_check
          %p447 = pneg %p287
        $region42: #{residual_gated_gcn_layer.3} parent=11 // pred_check_branch
          %449 = sbr.rel (%p447) target = $region44
        $region43: #{residual_gated_gcn_layer.3} parent=11 // pred_region
          _
        $region44: #{residual_gated_gcn_layer.3} parent=11 // pred_fallthru
          _
      $region12: #{residual_gated_gcn_layer.3} parent=5 // pred_fallthru
        _
      %p450 = scmp.lt.s32.totalorder %s25, 2
      // Predicated region
      $region45: #{residual_gated_gcn_layer.3} parent=5 // pred_check
        %p451 = pneg %p450
      $region46: #{residual_gated_gcn_layer.3} parent=5 // pred_check_branch
        %453 = sbr.rel (%p451) target = $region48
      $region47: #{residual_gated_gcn_layer.3} parent=5 // pred_region
        // Predicated region
        $region49: #{residual_gated_gcn_layer.3} parent=47 // pred_check
          %p454 = pneg %p57
        $region50: #{residual_gated_gcn_layer.3} parent=47 // pred_check_branch
          %456 = sbr.rel (%p454) target = $region52
        $region51: #{residual_gated_gcn_layer.3} parent=47 // pred_region
          %p457 = scmp.lt.s32.totalorder %s32, 1
          %s458 = scalar_select %p457, %s32, 1
          %s459 = smul.addr %s458, 8
          %s460 = scalar_lea.vmem %s0, %s459
        $region52: #{residual_gated_gcn_layer.3} parent=47 // pred_fallthru
          _
        // Predicated region
        $region53: #{residual_gated_gcn_layer.3} parent=47 // pred_check
          %p461 = pneg %p85
        $region54: #{residual_gated_gcn_layer.3} parent=47 // pred_check_branch
          %463 = sbr.rel (%p461) target = $region56
        $region55: #{residual_gated_gcn_layer.3} parent=47 // pred_region
          %p464 = scmp.lt.s32.totalorder %s32, 1
          %s465 = scalar_select %p464, %s32, 1
          %p466 = scmp.lt.s32.totalorder %s33, 0
          %s467 = scalar_select %p466, %s33, 0
          %s468 = sadd.s32 %s467, %s465
          %s469 = smul.addr %s468, 8
          %s470 = scalar_lea.vmem %s1, %s469
        $region56: #{residual_gated_gcn_layer.3} parent=47 // pred_fallthru
          _
        // Predicated region
        $region57: #{residual_gated_gcn_layer.3} parent=47 // pred_check
          %p471 = pneg %p113
        $region58: #{residual_gated_gcn_layer.3} parent=47 // pred_check_branch
          %473 = sbr.rel (%p471) target = $region60
        $region59: #{residual_gated_gcn_layer.3} parent=47 // pred_region
          %s474 = sand.u32 %s103, 1
          %s475 = scalar_lea.sflag [#allocation3], %s474
          %s476 = sand.u32 %s103, 1
          %s477 = smul.addr %s476, 64
          %s478 = scalar_lea.vmem [#allocation2], %s477
          %s479 = smul.u32 8, %s33
          %s481 = ssub.s32 1024, 1024
          %482 = vsyncadd %s475, %s481
          %s483 = smul.addr %s32, 8
          %s484 = sadd.s32 %s479, %s483
          %s485 = smul.addr %s484, 128
          %s486 = scalar_lea.hbm %s2, %s485
          %s487 = sshll.u32 %s478, 4
          %s488 = int_to_ptr.vmem [resolvable:$true] %s487
          %493 = dma.hbm_to_vmem [thread:$0]  %s486, 1024, %s488, %s475, 128, 128, 8
        $region60: #{residual_gated_gcn_layer.3} parent=47 // pred_fallthru
          _
      $region48: #{residual_gated_gcn_layer.3} parent=5 // pred_fallthru
        _
      %p494 = scmp.le.s32.totalorder 1, %s25
      %p495 = scmp.lt.s32.totalorder %s25, 3
      %p496 = pnand %p494, %p495
      %p497 = pneg %p496
      // Predicated region
      $region61: #{residual_gated_gcn_layer.3} parent=5 // pred_check
        _
      $region62: #{residual_gated_gcn_layer.3} parent=5 // pred_check_branch
        %499 = sbr.rel (%p496) target = $region64
      $region63: #{residual_gated_gcn_layer.3} parent=5 // pred_region
        %s500 = ssub.s32 %s25, 1
        %s501 = sand.u32 %s106, 1
        %s502 = scalar_lea.sflag [#allocation3], %s501
        %s503 = sand.u32 %s106, 1
        %s504 = smul.addr %s503, 64
        %s505 = scalar_lea.vmem [#allocation2], %s504
        // Predicated region
        $region65: #{residual_gated_gcn_layer.3} parent=63 // pred_check
          %p506 = pneg %p119
        $region66: #{residual_gated_gcn_layer.3} parent=63 // pred_check_branch
          %508 = sbr.rel (%p506) target = $region68
        $region67: #{residual_gated_gcn_layer.3} parent=63 // pred_region
          %509 = dma.done %s502, 1024
        $region68: #{residual_gated_gcn_layer.3} parent=63 // pred_fallthru
          _
        // Predicated region
        $region69: #{residual_gated_gcn_layer.3} parent=63 // pred_check
          %p510 = pneg %p140
        $region70: #{residual_gated_gcn_layer.3} parent=63 // pred_check_branch
          %512 = sbr.rel (%p510) target = $region72
        $region71: #{residual_gated_gcn_layer.3} parent=63 // pred_region
          %513 = dma.done [#allocation5], 512
        $region72: #{residual_gated_gcn_layer.3} parent=63 // pred_fallthru
          _
        // Predicated region
        $region73: #{residual_gated_gcn_layer.3} parent=63 // pred_check
          %p514 = pneg %p182
        $region74: #{residual_gated_gcn_layer.3} parent=63 // pred_check_branch
          %516 = sbr.rel (%p514) target = $region76
        $region75: #{residual_gated_gcn_layer.3} parent=63 // pred_region
          %517 = dma.done [#allocation5], 512
        $region76: #{residual_gated_gcn_layer.3} parent=63 // pred_fallthru
          _
        // Predicated region
        $region77: #{residual_gated_gcn_layer.3} parent=63 // pred_check
          %p518 = pneg %p224
        $region78: #{residual_gated_gcn_layer.3} parent=63 // pred_check_branch
          %520 = sbr.rel (%p518) target = $region80
        $region79: #{residual_gated_gcn_layer.3} parent=63 // pred_region
          %521 = dma.done [#allocation8], 512
        $region80: #{residual_gated_gcn_layer.3} parent=63 // pred_fallthru
          _
        // Predicated region
        $region81: #{residual_gated_gcn_layer.3} parent=63 // pred_check
          %p522 = pneg %p266
        $region82: #{residual_gated_gcn_layer.3} parent=63 // pred_check_branch
          %524 = sbr.rel (%p522) target = $region84
        $region83: #{residual_gated_gcn_layer.3} parent=63 // pred_region
          %525 = dma.done [#allocation8], 512
        $region84: #{residual_gated_gcn_layer.3} parent=63 // pred_fallthru
          _
        %p526 = scmp.lt.s32.totalorder %s34, 1
        %s527 = scalar_select %p526, %s34, 1
        %s528 = smul.addr %s527, 8
        %s529 = scalar_lea.vmem %s0, %s528
        %p530 = pneg %p63
        %p531 = pneg %p60
        %p532 = scmp.lt.s32.totalorder %s34, 1
        %s533 = scalar_select %p532, %s34, 1
        %p534 = scmp.lt.s32.totalorder %s35, 0
        %s535 = scalar_select %p534, %s35, 0
        %s536 = sadd.s32 %s535, %s533
        %s537 = smul.addr %s536, 8
        %s538 = scalar_lea.vmem %s1, %s537
        %p539 = pneg %p91
        %p540 = pneg %p88
        %s541 = sand.u32 %s106, 1
        %s542 = scalar_lea.sflag [#allocation3], %s541
        %s543 = sand.u32 %s106, 1
        %s544 = smul.addr %s543, 64
        %s545 = scalar_lea.vmem [#allocation2], %s544
        %p546 = pneg %p119
        %p547 = pneg %p116
        %p548 = pneg %p140
        %p549 = pneg %p137
        %p550 = pneg %p161
        %p551 = pneg %p158
        %p552 = pneg %p182
        %p553 = pneg %p179
        %p554 = pneg %p203
        %p555 = pneg %p200
        %p556 = pneg %p224
        %p557 = pneg %p221
        %p558 = pneg %p245
        %p559 = pneg %p242
        %p560 = pneg %p266
        %p561 = pneg %p263
        %p562 = pneg %p287
        %p563 = pneg %p284
        %p564 = pneg %p315
        %p565 = pneg %p312
        %s566 = smul.u32 8, %s35
        %p567 = scmp.lt.s32.totalorder %s34, 1
        %s568 = scalar_select %p567, %s34, 1
        %p569 = scmp.lt.s32.totalorder %s566, 7
        %s570 = scalar_select %p569, %s566, 7
        %s571 = smul.addr %s568, 8
        %s572 = sadd.s32 %s570, %s571
        %s573 = smul.addr %s572, 8
        %s574 = scalar_lea.vmem %s11, %s573
        %p575 = pneg %p343
        %p576 = pneg %p340
        %p577 = scmp.lt.s32.totalorder %s34, 1
        %s578 = scalar_select %p577, %s34, 1
        %p579 = scmp.lt.s32.totalorder %s35, 0
        %s580 = scalar_select %p579, %s35, 0
        %s581 = sadd.s32 %s580, %s578
        %s582 = smul.addr %s581, 8
        %s583 = scalar_lea.vmem %s12, %s582
        %p584 = pneg %p371
        %p585 = pneg %p368
        %p586 = scmp.lt.s32.totalorder %s34, 1
        %s587 = scalar_select %p586, %s34, 1
        %p588 = scmp.lt.s32.totalorder %s35, 0
        %s589 = scalar_select %p588, %s35, 0
        %s590 = sadd.s32 %s589, %s587
        %s591 = smul.addr %s590, 4
        %s592 = scalar_lea.vmem %s13, %s591
        %p593 = scmp.lt.s32.totalorder %s34, 1
        %s594 = scalar_select %p593, %s34, 1
        %s595 = smul.addr %s594, 8
        %s596 = scalar_lea.vmem %s0, %s595
        %p597 = scmp.lt.s32.totalorder %s34, 1
        %s598 = scalar_select %p597, %s34, 1
        %p599 = scmp.lt.s32.totalorder %s35, 0
        %s600 = scalar_select %p599, %s35, 0
        %s601 = sadd.s32 %s600, %s598
        %s602 = smul.addr %s601, 8
        %s603 = scalar_lea.vmem %s1, %s602
        %s604 = smul.u32 8, %s35
        %s605 = smul.u32 8, %s35
        %p606 = scmp.lt.s32.totalorder %s34, 1
        %s607 = scalar_select %p606, %s34, 1
        %p608 = scmp.lt.s32.totalorder %s605, 7
        %s609 = scalar_select %p608, %s605, 7
        %s610 = smul.addr %s607, 8
        %s611 = sadd.s32 %s609, %s610
        %s612 = smul.addr %s611, 8
        %s613 = scalar_lea.vmem %s11, %s612
        %s614 = smul.u32 8, %s35
        %p615 = scmp.lt.s32.totalorder %s34, 1
        %s616 = scalar_select %p615, %s34, 1
        %p617 = scmp.lt.s32.totalorder %s35, 0
        %s618 = scalar_select %p617, %s35, 0
        %s619 = sadd.s32 %s618, %s616
        %s620 = smul.addr %s619, 8
        %s621 = scalar_lea.vmem %s12, %s620
        %p622 = scmp.lt.s32.totalorder %s34, 1
        %s623 = scalar_select %p622, %s34, 1
        %p624 = scmp.lt.s32.totalorder %s35, 0
        %s625 = scalar_select %p624, %s35, 0
        %s626 = sadd.s32 %s625, %s623
        %s627 = smul.addr %s626, 4
        %s628 = scalar_lea.vmem %s13, %s627
        %v629 = vld [vmem:[%s596] sm:$0xff]
        %v630 = vld [vmem:[%s603] sm:$0xff]
        %v631 = vld [vmem:[#allocation6] sm:$0xff]
        %v632 = vld [vmem:[#allocation6 + $0x8] sm:$0xff]
        %v633 = vld [vmem:[#allocation6 + $0x10] sm:$0xff]
        %v634 = vld [vmem:[#allocation6 + $0x18] sm:$0xff]
        %v635 = vld [vmem:[%s6] sm:$0x1]
        %v637 = vlaneseq
        %v638 = vshrl.u32 %v637, 7
        %v639 = vsub.s32 0, %v638
        %v640 = vrot.slane %v635, %v639
        %vm642 = vcmask 261120
        %v644 = vsel %vm642, %v629, 0
        %646 = vmatprep.subr.mxu0 0.0
        %647 = vmatpush1.msra.mxu0 0.0
        %648 = vmatprep.subr.mxu0 0.0
        %649 = vmatpush1.msra.mxu0 0.0
        %650 = vmatprep.subr.mxu0 0.0
        %651 = vmatpush1.msra.mxu0 0.0
        %652 = vmatprep.subr.mxu0 0.0
        %653 = vmatpush1.msra.mxu0 0.0
        %654 = vmatprep.subr.mxu0 0.0
        %655 = vmatpush1.msra.mxu0 0.0
        %656 = vmatprep.subr.mxu0 0.0
        %657 = vmatpush1.msra.mxu0 0.0
        %658 = vmatprep.subr.mxu0 0.0
        %659 = vmatpush1.msra.mxu0 0.0
        %660 = vmatprep.subr.mxu0 0.0
        %661 = vmatpush1.msra.mxu0 0.0
        %662 = vmatprep.subr.mxu0 0.0
        %663 = vmatpush1.msra.mxu0 0.0
        %664 = vmatprep.subr.mxu0 0.0
        %665 = vmatpush1.msra.mxu0 0.0
        %666 = vmatprep.subr.mxu0 0.0
        %667 = vmatpush1.msra.mxu0 0.0
        %668 = vmatprep.subr.mxu0 0.0
        %669 = vmatpush1.msra.mxu0 0.0
        %670 = vmatprep.subr.mxu0 0.0
        %671 = vmatpush1.msra.mxu0 %v634
        %672 = vmatprep.subr.mxu0 0.0
        %673 = vmatpush1.msra.mxu0 %v633
        %674 = vmatprep.subr.mxu0 0.0
        %675 = vmatpush1.msra.mxu0 %v632
        %676 = vmatprep.subr.mxu0 0.0
        %677 = vmatpush1.msra.mxu0 %v631
        %678 = vmatprep.subr.mxu0 0.0
        %679 = vmatpush2.msra.mxu0 0.0
        %680 = vmatprep.subr.mxu0 0.0
        %681 = vmatpush2.msra.mxu0 0.0
        %682 = vmatprep.subr.mxu0 0.0
        %683 = vmatpush2.msra.mxu0 0.0
        %684 = vmatprep.subr.mxu0 0.0
        %685 = vmatpush2.msra.mxu0 0.0
        %686 = vmatprep.subr.mxu0 0.0
        %687 = vmatpush2.msra.mxu0 0.0
        %688 = vmatprep.subr.mxu0 0.0
        %689 = vmatpush2.msra.mxu0 0.0
        %690 = vmatprep.subr.mxu0 0.0
        %691 = vmatpush2.msra.mxu0 0.0
        %692 = vmatprep.subr.mxu0 0.0
        %693 = vmatpush2.msra.mxu0 0.0
        %694 = vmatprep.subr.mxu0 0.0
        %695 = vmatpush2.msra.mxu0 0.0
        %696 = vmatprep.subr.mxu0 0.0
        %697 = vmatpush2.msra.mxu0 0.0
        %698 = vmatprep.subr.mxu0 0.0
        %699 = vmatpush2.msra.mxu0 0.0
        %700 = vmatprep.subr.mxu0 0.0
        %701 = vmatpush2.msra.mxu0 0.0
        %702 = vmatprep.subr.mxu0 0.0
        %703 = vmatpush2.msra.mxu0 0.0
        %704 = vmatprep.subr.mxu0 0.0
        %705 = vmatpush2.msra.mxu0 0.0
        %706 = vmatprep.subr.mxu0 0.0
        %707 = vmatpush2.msra.mxu0 0.0
        %708 = vmatprep.subr.mxu0 0.0
        %709 = vmatpush2.msra.mxu0 0.0
        %710 = vmatprep.mubr.f32.mxu0 0.0
        %711 = vmatmul.mubr.f32.gmra.mxu0 %v644
        %v712 = vpop.f32.mrf.mxu0
        %v713 = vadd.f32 %v640, %v712
        %v714 = vpop.f32.mrf.mxu0
        %715 = vdwg.mxu0
        %v716 = vld [vmem:[#allocation9] sm:$0xff]
        %v717 = vld [vmem:[#allocation9 + $0x8] sm:$0xff]
        %v718 = vld [vmem:[#allocation9 + $0x10] sm:$0xff]
        %v719 = vld [vmem:[#allocation9 + $0x18] sm:$0xff]
        %v720 = vld [vmem:[%s10] sm:$0x1]
        %v722 = vlaneseq
        %v723 = vshrl.u32 %v722, 7
        %v724 = vsub.s32 0, %v723
        %v725 = vrot.slane %v720, %v724
        %727 = vmatprep.subr.mxu0 0.0
        %728 = vmatpush1.msra.mxu0 0.0
        %729 = vmatprep.subr.mxu0 0.0
        %730 = vmatpush1.msra.mxu0 0.0
        %731 = vmatprep.subr.mxu0 0.0
        %732 = vmatpush1.msra.mxu0 0.0
        %733 = vmatprep.subr.mxu0 0.0
        %734 = vmatpush1.msra.mxu0 0.0
        %735 = vmatprep.subr.mxu0 0.0
        %736 = vmatpush1.msra.mxu0 0.0
        %737 = vmatprep.subr.mxu0 0.0
        %738 = vmatpush1.msra.mxu0 0.0
        %739 = vmatprep.subr.mxu0 0.0
        %740 = vmatpush1.msra.mxu0 0.0
        %741 = vmatprep.subr.mxu0 0.0
        %742 = vmatpush1.msra.mxu0 0.0
        %743 = vmatprep.subr.mxu0 0.0
        %744 = vmatpush1.msra.mxu0 0.0
        %745 = vmatprep.subr.mxu0 0.0
        %746 = vmatpush1.msra.mxu0 0.0
        %747 = vmatprep.subr.mxu0 0.0
        %748 = vmatpush1.msra.mxu0 0.0
        %749 = vmatprep.subr.mxu0 0.0
        %750 = vmatpush1.msra.mxu0 0.0
        %751 = vmatprep.subr.mxu0 0.0
        %752 = vmatpush1.msra.mxu0 %v719
        %753 = vmatprep.subr.mxu0 0.0
        %754 = vmatpush1.msra.mxu0 %v718
        %755 = vmatprep.subr.mxu0 0.0
        %756 = vmatpush1.msra.mxu0 %v717
        %757 = vmatprep.subr.mxu0 0.0
        %758 = vmatpush1.msra.mxu0 %v716
        %759 = vmatprep.subr.mxu0 0.0
        %760 = vmatpush2.msra.mxu0 0.0
        %761 = vmatprep.subr.mxu0 0.0
        %762 = vmatpush2.msra.mxu0 0.0
        %763 = vmatprep.subr.mxu0 0.0
        %764 = vmatpush2.msra.mxu0 0.0
        %765 = vmatprep.subr.mxu0 0.0
        %766 = vmatpush2.msra.mxu0 0.0
        %767 = vmatprep.subr.mxu0 0.0
        %768 = vmatpush2.msra.mxu0 0.0
        %769 = vmatprep.subr.mxu0 0.0
        %770 = vmatpush2.msra.mxu0 0.0
        %771 = vmatprep.subr.mxu0 0.0
        %772 = vmatpush2.msra.mxu0 0.0
        %773 = vmatprep.subr.mxu0 0.0
        %774 = vmatpush2.msra.mxu0 0.0
        %775 = vmatprep.subr.mxu0 0.0
        %776 = vmatpush2.msra.mxu0 0.0
        %777 = vmatprep.subr.mxu0 0.0
        %778 = vmatpush2.msra.mxu0 0.0
        %779 = vmatprep.subr.mxu0 0.0
        %780 = vmatpush2.msra.mxu0 0.0
        %781 = vmatprep.subr.mxu0 0.0
        %782 = vmatpush2.msra.mxu0 0.0
        %783 = vmatprep.subr.mxu0 0.0
        %784 = vmatpush2.msra.mxu0 0.0
        %785 = vmatprep.subr.mxu0 0.0
        %786 = vmatpush2.msra.mxu0 0.0
        %787 = vmatprep.subr.mxu0 0.0
        %788 = vmatpush2.msra.mxu0 0.0
        %789 = vmatprep.subr.mxu0 0.0
        %790 = vmatpush2.msra.mxu0 0.0
        %791 = vmatprep.mubr.f32.mxu0 0.0
        %792 = vmatmul.mubr.f32.gmra.mxu0 %v644
        %v793 = vpop.f32.mrf.mxu0
        %v794 = vadd.f32 %v725, %v793
        %v795 = vpop.f32.mrf.mxu0
        %796 = vdwg.mxu0
        %v798 = vsel %vm642, %v630, 0
        %800 = vmatprep.subr.mxu0 0.0
        %801 = vmatpush1.msra.mxu0 0.0
        %802 = vmatprep.subr.mxu0 0.0
        %803 = vmatpush1.msra.mxu0 0.0
        %804 = vmatprep.subr.mxu0 0.0
        %805 = vmatpush1.msra.mxu0 0.0
        %806 = vmatprep.subr.mxu0 0.0
        %807 = vmatpush1.msra.mxu0 0.0
        %808 = vmatprep.subr.mxu0 0.0
        %809 = vmatpush1.msra.mxu0 0.0
        %810 = vmatprep.subr.mxu0 0.0
        %811 = vmatpush1.msra.mxu0 0.0
        %812 = vmatprep.subr.mxu0 0.0
        %813 = vmatpush1.msra.mxu0 0.0
        %814 = vmatprep.subr.mxu0 0.0
        %815 = vmatpush1.msra.mxu0 0.0
        %816 = vmatprep.subr.mxu0 0.0
        %817 = vmatpush1.msra.mxu0 0.0
        %818 = vmatprep.subr.mxu0 0.0
        %819 = vmatpush1.msra.mxu0 0.0
        %820 = vmatprep.subr.mxu0 0.0
        %821 = vmatpush1.msra.mxu0 0.0
        %822 = vmatprep.subr.mxu0 0.0
        %823 = vmatpush1.msra.mxu0 0.0
        %824 = vmatprep.subr.mxu0 0.0
        %825 = vmatpush1.msra.mxu0 %v634
        %826 = vmatprep.subr.mxu0 0.0
        %827 = vmatpush1.msra.mxu0 %v633
        %828 = vmatprep.subr.mxu0 0.0
        %829 = vmatpush1.msra.mxu0 %v632
        %830 = vmatprep.subr.mxu0 0.0
        %831 = vmatpush1.msra.mxu0 %v631
        %832 = vmatprep.subr.mxu0 0.0
        %833 = vmatpush2.msra.mxu0 0.0
        %834 = vmatprep.subr.mxu0 0.0
        %835 = vmatpush2.msra.mxu0 0.0
        %836 = vmatprep.subr.mxu0 0.0
        %837 = vmatpush2.msra.mxu0 0.0
        %838 = vmatprep.subr.mxu0 0.0
        %839 = vmatpush2.msra.mxu0 0.0
        %840 = vmatprep.subr.mxu0 0.0
        %841 = vmatpush2.msra.mxu0 0.0
        %842 = vmatprep.subr.mxu0 0.0
        %843 = vmatpush2.msra.mxu0 0.0
        %844 = vmatprep.subr.mxu0 0.0
        %845 = vmatpush2.msra.mxu0 0.0
        %846 = vmatprep.subr.mxu0 0.0
        %847 = vmatpush2.msra.mxu0 0.0
        %848 = vmatprep.subr.mxu0 0.0
        %849 = vmatpush2.msra.mxu0 0.0
        %850 = vmatprep.subr.mxu0 0.0
        %851 = vmatpush2.msra.mxu0 0.0
        %852 = vmatprep.subr.mxu0 0.0
        %853 = vmatpush2.msra.mxu0 0.0
        %854 = vmatprep.subr.mxu0 0.0
        %855 = vmatpush2.msra.mxu0 0.0
        %856 = vmatprep.subr.mxu0 0.0
        %857 = vmatpush2.msra.mxu0 0.0
        %858 = vmatprep.subr.mxu0 0.0
        %859 = vmatpush2.msra.mxu0 0.0
        %860 = vmatprep.subr.mxu0 0.0
        %861 = vmatpush2.msra.mxu0 0.0
        %862 = vmatprep.subr.mxu0 0.0
        %863 = vmatpush2.msra.mxu0 0.0
        %864 = vmatprep.mubr.f32.mxu0 0.0
        %865 = vmatmul.mubr.f32.gmra.mxu0 %v798
        %v866 = vpop.f32.mrf.mxu0
        %v867 = vadd.f32 %v640, %v866
        %v868 = vpop.f32.mrf.mxu0
        %869 = vdwg.mxu0
        %v870 = vld [vmem:[#allocation7] sm:$0xff]
        %v871 = vld [vmem:[#allocation7 + $0x8] sm:$0xff]
        %v872 = vld [vmem:[#allocation7 + $0x10] sm:$0xff]
        %v873 = vld [vmem:[#allocation7 + $0x18] sm:$0xff]
        %v874 = vld [vmem:[%s8] sm:$0x1]
        %v876 = vlaneseq
        %v877 = vshrl.u32 %v876, 7
        %v878 = vsub.s32 0, %v877
        %v879 = vrot.slane %v874, %v878
        %881 = vmatprep.subr.mxu0 0.0
        %882 = vmatpush1.msra.mxu0 0.0
        %883 = vmatprep.subr.mxu0 0.0
        %884 = vmatpush1.msra.mxu0 0.0
        %885 = vmatprep.subr.mxu0 0.0
        %886 = vmatpush1.msra.mxu0 0.0
        %887 = vmatprep.subr.mxu0 0.0
        %888 = vmatpush1.msra.mxu0 0.0
        %889 = vmatprep.subr.mxu0 0.0
        %890 = vmatpush1.msra.mxu0 0.0
        %891 = vmatprep.subr.mxu0 0.0
        %892 = vmatpush1.msra.mxu0 0.0
        %893 = vmatprep.subr.mxu0 0.0
        %894 = vmatpush1.msra.mxu0 0.0
        %895 = vmatprep.subr.mxu0 0.0
        %896 = vmatpush1.msra.mxu0 0.0
        %897 = vmatprep.subr.mxu0 0.0
        %898 = vmatpush1.msra.mxu0 0.0
        %899 = vmatprep.subr.mxu0 0.0
        %900 = vmatpush1.msra.mxu0 0.0
        %901 = vmatprep.subr.mxu0 0.0
        %902 = vmatpush1.msra.mxu0 0.0
        %903 = vmatprep.subr.mxu0 0.0
        %904 = vmatpush1.msra.mxu0 0.0
        %905 = vmatprep.subr.mxu0 0.0
        %906 = vmatpush1.msra.mxu0 %v873
        %907 = vmatprep.subr.mxu0 0.0
        %908 = vmatpush1.msra.mxu0 %v872
        %909 = vmatprep.subr.mxu0 0.0
        %910 = vmatpush1.msra.mxu0 %v871
        %911 = vmatprep.subr.mxu0 0.0
        %912 = vmatpush1.msra.mxu0 %v870
        %913 = vmatprep.subr.mxu0 0.0
        %914 = vmatpush2.msra.mxu0 0.0
        %915 = vmatprep.subr.mxu0 0.0
        %916 = vmatpush2.msra.mxu0 0.0
        %917 = vmatprep.subr.mxu0 0.0
        %918 = vmatpush2.msra.mxu0 0.0
        %919 = vmatprep.subr.mxu0 0.0
        %920 = vmatpush2.msra.mxu0 0.0
        %921 = vmatprep.subr.mxu0 0.0
        %922 = vmatpush2.msra.mxu0 0.0
        %923 = vmatprep.subr.mxu0 0.0
        %924 = vmatpush2.msra.mxu0 0.0
        %925 = vmatprep.subr.mxu0 0.0
        %926 = vmatpush2.msra.mxu0 0.0
        %927 = vmatprep.subr.mxu0 0.0
        %928 = vmatpush2.msra.mxu0 0.0
        %929 = vmatprep.subr.mxu0 0.0
        %930 = vmatpush2.msra.mxu0 0.0
        %931 = vmatprep.subr.mxu0 0.0
        %932 = vmatpush2.msra.mxu0 0.0
        %933 = vmatprep.subr.mxu0 0.0
        %934 = vmatpush2.msra.mxu0 0.0
        %935 = vmatprep.subr.mxu0 0.0
        %936 = vmatpush2.msra.mxu0 0.0
        %937 = vmatprep.subr.mxu0 0.0
        %938 = vmatpush2.msra.mxu0 0.0
        %939 = vmatprep.subr.mxu0 0.0
        %940 = vmatpush2.msra.mxu0 0.0
        %941 = vmatprep.subr.mxu0 0.0
        %942 = vmatpush2.msra.mxu0 0.0
        %943 = vmatprep.subr.mxu0 0.0
        %944 = vmatpush2.msra.mxu0 0.0
        %945 = vmatprep.mubr.f32.mxu0 0.0
        %946 = vmatmul.mubr.f32.gmra.mxu0 %v798
        %v947 = vpop.f32.mrf.mxu0
        %v948 = vadd.f32 %v879, %v947
        %v949 = vpop.f32.mrf.mxu0
        %950 = vdwg.mxu0
        %v951 = vld [vmem:[%s505] sm:$0xff]
        %v952 = vld [vmem:[%s505 + $0x8] sm:$0xff]
        %v953 = vld [vmem:[%s505 + $0x10] sm:$0xff]
        %v954 = vld [vmem:[%s505 + $0x18] sm:$0xff]
        %v955 = vld [vmem:[%s505 + $0x20] sm:$0xff]
        %v956 = vld [vmem:[%s505 + $0x28] sm:$0xff]
        %v957 = vld [vmem:[%s505 + $0x30] sm:$0xff]
        %v958 = vld [vmem:[%s505 + $0x38] sm:$0xff]
        %v959 = vld [vmem:[#allocation4] sm:$0xff]
        %v960 = vld [vmem:[#allocation4 + $0x8] sm:$0xff]
        %v961 = vld [vmem:[#allocation4 + $0x10] sm:$0xff]
        %v962 = vld [vmem:[#allocation4 + $0x18] sm:$0xff]
        %v963 = vld [vmem:[%s4] sm:$0x1]
        %v965 = vlaneseq
        %v966 = vshrl.u32 %v965, 7
        %v967 = vsub.s32 0, %v966
        %v968 = vrot.slane %v963, %v967
        %v971 = vsel %vm642, %v951, 0
        %v974 = vsel %vm642, %v952, 0
        %v977 = vsel %vm642, %v953, 0
        %v980 = vsel %vm642, %v954, 0
        %v983 = vsel %vm642, %v955, 0
        %v986 = vsel %vm642, %v956, 0
        %v989 = vsel %vm642, %v957, 0
        %v992 = vsel %vm642, %v958, 0
        %994 = vmatprep.subr.mxu0 0.0
        %995 = vmatpush1.msra.mxu0 0.0
        %996 = vmatprep.subr.mxu0 0.0
        %997 = vmatpush1.msra.mxu0 0.0
        %998 = vmatprep.subr.mxu0 0.0
        %999 = vmatpush1.msra.mxu0 0.0
        %1000 = vmatprep.subr.mxu0 0.0
        %1001 = vmatpush1.msra.mxu0 0.0
        %1002 = vmatprep.subr.mxu0 0.0
        %1003 = vmatpush1.msra.mxu0 0.0
        %1004 = vmatprep.subr.mxu0 0.0
        %1005 = vmatpush1.msra.mxu0 0.0
        %1006 = vmatprep.subr.mxu0 0.0
        %1007 = vmatpush1.msra.mxu0 0.0
        %1008 = vmatprep.subr.mxu0 0.0
        %1009 = vmatpush1.msra.mxu0 0.0
        %1010 = vmatprep.subr.mxu0 0.0
        %1011 = vmatpush1.msra.mxu0 0.0
        %1012 = vmatprep.subr.mxu0 0.0
        %1013 = vmatpush1.msra.mxu0 0.0
        %1014 = vmatprep.subr.mxu0 0.0
        %1015 = vmatpush1.msra.mxu0 0.0
        %1016 = vmatprep.subr.mxu0 0.0
        %1017 = vmatpush1.msra.mxu0 0.0
        %1018 = vmatprep.subr.mxu0 0.0
        %1019 = vmatpush1.msra.mxu0 %v962
        %1020 = vmatprep.subr.mxu0 0.0
        %1021 = vmatpush1.msra.mxu0 %v961
        %1022 = vmatprep.subr.mxu0 0.0
        %1023 = vmatpush1.msra.mxu0 %v960
        %1024 = vmatprep.subr.mxu0 0.0
        %1025 = vmatpush1.msra.mxu0 %v959
        %1026 = vmatprep.subr.mxu0 0.0
        %1027 = vmatpush2.msra.mxu0 0.0
        %1028 = vmatprep.subr.mxu0 0.0
        %1029 = vmatpush2.msra.mxu0 0.0
        %1030 = vmatprep.subr.mxu0 0.0
        %1031 = vmatpush2.msra.mxu0 0.0
        %1032 = vmatprep.subr.mxu0 0.0
        %1033 = vmatpush2.msra.mxu0 0.0
        %1034 = vmatprep.subr.mxu0 0.0
        %1035 = vmatpush2.msra.mxu0 0.0
        %1036 = vmatprep.subr.mxu0 0.0
        %1037 = vmatpush2.msra.mxu0 0.0
        %1038 = vmatprep.subr.mxu0 0.0
        %1039 = vmatpush2.msra.mxu0 0.0
        %1040 = vmatprep.subr.mxu0 0.0
        %1041 = vmatpush2.msra.mxu0 0.0
        %1042 = vmatprep.subr.mxu0 0.0
        %1043 = vmatpush2.msra.mxu0 0.0
        %1044 = vmatprep.subr.mxu0 0.0
        %1045 = vmatpush2.msra.mxu0 0.0
        %1046 = vmatprep.subr.mxu0 0.0
        %1047 = vmatpush2.msra.mxu0 0.0
        %1048 = vmatprep.subr.mxu0 0.0
        %1049 = vmatpush2.msra.mxu0 0.0
        %1050 = vmatprep.subr.mxu0 0.0
        %1051 = vmatpush2.msra.mxu0 0.0
        %1052 = vmatprep.subr.mxu0 0.0
        %1053 = vmatpush2.msra.mxu0 0.0
        %1054 = vmatprep.subr.mxu0 0.0
        %1055 = vmatpush2.msra.mxu0 0.0
        %1056 = vmatprep.subr.mxu0 0.0
        %1057 = vmatpush2.msra.mxu0 0.0
        %1058 = vmatprep.mubr.f32.mxu0 0.0
        %1059 = vmatmul.mubr.f32.gmra.mxu0 %v971
        %v1060 = vpop.f32.mrf.mxu0
        %v1061 = vadd.f32 %v968, %v1060
        %v1062 = vpop.f32.mrf.mxu0
        %1063 = vmatprep.mubr.f32.mxu0 0.0
        %1064 = vmatmul.mubr.f32.gmra.mxu0 %v974
        %v1065 = vpop.f32.mrf.mxu0
        %v1066 = vadd.f32 %v968, %v1065
        %v1067 = vpop.f32.mrf.mxu0
        %1068 = vmatprep.mubr.f32.mxu0 0.0
        %1069 = vmatmul.mubr.f32.gmra.mxu0 %v977
        %v1070 = vpop.f32.mrf.mxu0
        %v1071 = vadd.f32 %v968, %v1070
        %v1072 = vpop.f32.mrf.mxu0
        %1073 = vmatprep.mubr.f32.mxu0 0.0
        %1074 = vmatmul.mubr.f32.gmra.mxu0 %v980
        %v1075 = vpop.f32.mrf.mxu0
        %v1076 = vadd.f32 %v968, %v1075
        %v1077 = vpop.f32.mrf.mxu0
        %1078 = vmatprep.mubr.f32.mxu0 0.0
        %1079 = vmatmul.mubr.f32.gmra.mxu0 %v983
        %v1080 = vpop.f32.mrf.mxu0
        %v1081 = vadd.f32 %v968, %v1080
        %v1082 = vpop.f32.mrf.mxu0
        %1083 = vmatprep.mubr.f32.mxu0 0.0
        %1084 = vmatmul.mubr.f32.gmra.mxu0 %v986
        %v1085 = vpop.f32.mrf.mxu0
        %v1086 = vadd.f32 %v968, %v1085
        %v1087 = vpop.f32.mrf.mxu0
        %1088 = vmatprep.mubr.f32.mxu0 0.0
        %1089 = vmatmul.mubr.f32.gmra.mxu0 %v989
        %v1090 = vpop.f32.mrf.mxu0
        %v1091 = vadd.f32 %v968, %v1090
        %v1092 = vpop.f32.mrf.mxu0
        %1093 = vmatprep.mubr.f32.mxu0 0.0
        %1094 = vmatmul.mubr.f32.gmra.mxu0 %v992
        %v1095 = vpop.f32.mrf.mxu0
        %v1096 = vadd.f32 %v968, %v1095
        %v1097 = vpop.f32.mrf.mxu0
        %1098 = vdwg.mxu0
        %v1100 = vcombine.high %v867, %v867
        %v1102 = vunpack.c.l.s4 1966171168
        %v1103 = vunpack.c.0.s8 %v1102
        %v1104 = vlaneseq
        %v1105 = vshrl.u32 %v1104, 7
        %v1106 = vsub.s32 %v1103, %v1105
        %v1107 = vrot.slane %v867, %v1106
        %v1109 = vunpack.c.l.s4 1966171168
        %v1110 = vunpack.c.0.s8 %v1109
        %v1111 = vlaneseq
        %v1112 = vshrl.u32 %v1111, 7
        %v1113 = vsub.s32 %v1110, %v1112
        %v1114 = vrot.slane %v1100, %v1113
        %v1115 = vcombine.high %v1107, %v1107
        %v1116 = vcombine.high %v1114, %v1114
        %v1118 = vunpack.c.l.s4 1966171168
        %v1119 = vunpack.c.0.s8 %v1118
        %v1120 = vlaneseq
        %v1121 = vshrl.u32 %v1120, 7
        %v1122 = vsub.s32 %v1119, %v1121
        %v1123 = vrot.slane %v1107, %v1122
        %v1125 = vunpack.c.l.s4 1966171168
        %v1126 = vunpack.c.0.s8 %v1125
        %v1127 = vlaneseq
        %v1128 = vshrl.u32 %v1127, 7
        %v1129 = vsub.s32 %v1126, %v1128
        %v1130 = vrot.slane %v1114, %v1129
        %v1132 = vunpack.c.l.s4 1966171168
        %v1133 = vunpack.c.0.s8 %v1132
        %v1134 = vlaneseq
        %v1135 = vshrl.u32 %v1134, 7
        %v1136 = vsub.s32 %v1133, %v1135
        %v1137 = vrot.slane %v1115, %v1136
        %v1139 = vunpack.c.l.s4 1966171168
        %v1140 = vunpack.c.0.s8 %v1139
        %v1141 = vlaneseq
        %v1142 = vshrl.u32 %v1141, 7
        %v1143 = vsub.s32 %v1140, %v1142
        %v1144 = vrot.slane %v1116, %v1143
        %v1145 = vcombine.high %v1123, %v1123
        %v1146 = vcombine.high %v1130, %v1130
        %v1147 = vcombine.high %v1137, %v1137
        %v1148 = vcombine.high %v1144, %v1144
        %v1149 = vlaneseq
        %v1150 = vshrl.u32 %v1149, 7
        %v1151 = vsub.s32 0, %v1150
        %v1152 = vrot.slane %v1123, %v1151
        %v1153 = vlaneseq
        %v1154 = vshrl.u32 %v1153, 7
        %v1155 = vsub.s32 0, %v1154
        %v1156 = vrot.slane %v1137, %v1155
        %v1157 = vlaneseq
        %v1158 = vshrl.u32 %v1157, 7
        %v1159 = vsub.s32 0, %v1158
        %v1160 = vrot.slane %v1145, %v1159
        %v1161 = vlaneseq
        %v1162 = vshrl.u32 %v1161, 7
        %v1163 = vsub.s32 0, %v1162
        %v1164 = vrot.slane %v1147, %v1163
        %v1165 = vlaneseq
        %v1166 = vshrl.u32 %v1165, 7
        %v1167 = vsub.s32 0, %v1166
        %v1168 = vrot.slane %v1130, %v1167
        %v1169 = vlaneseq
        %v1170 = vshrl.u32 %v1169, 7
        %v1171 = vsub.s32 0, %v1170
        %v1172 = vrot.slane %v1144, %v1171
        %v1173 = vlaneseq
        %v1174 = vshrl.u32 %v1173, 7
        %v1175 = vsub.s32 0, %v1174
        %v1176 = vrot.slane %v1146, %v1175
        %v1177 = vlaneseq
        %v1178 = vshrl.u32 %v1177, 7
        %v1179 = vsub.s32 0, %v1178
        %v1180 = vrot.slane %v1148, %v1179
        %v1189 = vadd.f32 %v1061, %v1152
        %v1190 = vadd.f32 %v1066, %v1156
        %v1191 = vadd.f32 %v1071, %v1160
        %v1192 = vadd.f32 %v1076, %v1164
        %v1193 = vadd.f32 %v1081, %v1168
        %v1194 = vadd.f32 %v1086, %v1172
        %v1195 = vadd.f32 %v1091, %v1176
        %v1196 = vadd.f32 %v1096, %v1180
        %v1197 = vadd.f32 %v1189, %v713
        %v1198 = vadd.f32 %v1190, %v713
        %v1199 = vadd.f32 %v1191, %v713
        %v1200 = vadd.f32 %v1192, %v713
        %v1201 = vadd.f32 %v1193, %v713
        %v1202 = vadd.f32 %v1194, %v713
        %v1203 = vadd.f32 %v1195, %v713
        %v1204 = vadd.f32 %v1196, %v713
        %v1205 = vxor.u32 %v1197, 2147483648
        %v1206 = vxor.u32 %v1198, 2147483648
        %v1207 = vxor.u32 %v1199, 2147483648
        %v1208 = vxor.u32 %v1200, 2147483648
        %v1209 = vxor.u32 %v1201, 2147483648
        %v1210 = vxor.u32 %v1202, 2147483648
        %v1211 = vxor.u32 %v1203, 2147483648
        %v1212 = vxor.u32 %v1204, 2147483648
        %v1213 = vmul.f32 %v1205, 1.442695
        %v1214 = vpow.pop %v1213
        %v1215 = vmul.f32 %v1206, 1.442695
        %v1216 = vpow.pop %v1215
        %v1217 = vmul.f32 %v1207, 1.442695
        %v1218 = vpow.pop %v1217
        %v1219 = vmul.f32 %v1208, 1.442695
        %v1220 = vpow.pop %v1219
        %v1221 = vmul.f32 %v1209, 1.442695
        %v1222 = vpow.pop %v1221
        %v1223 = vmul.f32 %v1210, 1.442695
        %v1224 = vpow.pop %v1223
        %v1225 = vmul.f32 %v1211, 1.442695
        %v1226 = vpow.pop %v1225
        %v1227 = vmul.f32 %v1212, 1.442695
        %v1228 = vpow.pop %v1227
        %v1229 = vadd.f32 %v1214, 1.0
        %v1230 = vadd.f32 %v1216, 1.0
        %v1231 = vadd.f32 %v1218, 1.0
        %v1232 = vadd.f32 %v1220, 1.0
        %v1233 = vadd.f32 %v1222, 1.0
        %v1234 = vadd.f32 %v1224, 1.0
        %v1235 = vadd.f32 %v1226, 1.0
        %v1236 = vadd.f32 %v1228, 1.0
        %v1237 = vrcp.pop %v1229
        %v1238 = vmul.f32 1.0, %v1237
        %v1239 = vrcp.pop %v1230
        %v1240 = vmul.f32 1.0, %v1239
        %v1241 = vrcp.pop %v1231
        %v1242 = vmul.f32 1.0, %v1241
        %v1243 = vrcp.pop %v1232
        %v1244 = vmul.f32 1.0, %v1243
        %v1245 = vrcp.pop %v1233
        %v1246 = vmul.f32 1.0, %v1245
        %v1247 = vrcp.pop %v1234
        %v1248 = vmul.f32 1.0, %v1247
        %v1249 = vrcp.pop %v1235
        %v1250 = vmul.f32 1.0, %v1249
        %v1251 = vrcp.pop %v1236
        %v1252 = vmul.f32 1.0, %v1251
        %v1253 = vmul.f32 %v1238, %v794
        %v1254 = vmul.f32 %v1240, %v794
        %v1255 = vmul.f32 %v1242, %v794
        %v1256 = vmul.f32 %v1244, %v794
        %v1257 = vmul.f32 %v1246, %v794
        %v1258 = vmul.f32 %v1248, %v794
        %v1259 = vmul.f32 %v1250, %v794
        %v1260 = vmul.f32 %v1252, %v794
        %v1261 = vsel %vm642, %v1253, 0.0
        %v1262 = vrot.slane %v1261, 4
        %v1263 = vadd.f32 %v1261, %v1262
        %v1264 = vrot.slane %v1263, 2
        %v1265 = vadd.f32 %v1263, %v1264
        %v1266 = vrot.slane %v1265, 1
        %v1267 = vadd.f32 %v1265, %v1266
        %v1268 = vsel %vm642, %v1254, 0.0
        %v1269 = vrot.slane %v1268, 4
        %v1270 = vadd.f32 %v1268, %v1269
        %v1271 = vrot.slane %v1270, 2
        %v1272 = vadd.f32 %v1270, %v1271
        %v1273 = vrot.slane %v1272, 1
        %v1274 = vadd.f32 %v1272, %v1273
        %v1275 = vsel %vm642, %v1255, 0.0
        %v1276 = vrot.slane %v1275, 4
        %v1277 = vadd.f32 %v1275, %v1276
        %v1278 = vrot.slane %v1277, 2
        %v1279 = vadd.f32 %v1277, %v1278
        %v1280 = vrot.slane %v1279, 1
        %v1281 = vadd.f32 %v1279, %v1280
        %v1282 = vsel %vm642, %v1256, 0.0
        %v1283 = vrot.slane %v1282, 4
        %v1284 = vadd.f32 %v1282, %v1283
        %v1285 = vrot.slane %v1284, 2
        %v1286 = vadd.f32 %v1284, %v1285
        %v1287 = vrot.slane %v1286, 1
        %v1288 = vadd.f32 %v1286, %v1287
        %v1289 = vsel %vm642, %v1257, 0.0
        %v1290 = vrot.slane %v1289, 4
        %v1291 = vadd.f32 %v1289, %v1290
        %v1292 = vrot.slane %v1291, 2
        %v1293 = vadd.f32 %v1291, %v1292
        %v1294 = vrot.slane %v1293, 1
        %v1295 = vadd.f32 %v1293, %v1294
        %v1296 = vsel %vm642, %v1258, 0.0
        %v1297 = vrot.slane %v1296, 4
        %v1298 = vadd.f32 %v1296, %v1297
        %v1299 = vrot.slane %v1298, 2
        %v1300 = vadd.f32 %v1298, %v1299
        %v1301 = vrot.slane %v1300, 1
        %v1302 = vadd.f32 %v1300, %v1301
        %v1303 = vsel %vm642, %v1259, 0.0
        %v1304 = vrot.slane %v1303, 4
        %v1305 = vadd.f32 %v1303, %v1304
        %v1306 = vrot.slane %v1305, 2
        %v1307 = vadd.f32 %v1305, %v1306
        %v1308 = vrot.slane %v1307, 1
        %v1309 = vadd.f32 %v1307, %v1308
        %v1310 = vsel %vm642, %v1260, 0.0
        %v1311 = vrot.slane %v1310, 4
        %v1312 = vadd.f32 %v1310, %v1311
        %v1313 = vrot.slane %v1312, 2
        %v1314 = vadd.f32 %v1312, %v1313
        %v1315 = vrot.slane %v1314, 1
        %v1316 = vadd.f32 %v1314, %v1315
        %vm1325 = vcmask 1041409
        %v1326 = vsel %vm1325, %v1274, %v1267
        %vm1327 = vcmask 1042434
        %v1328 = vsel %vm1327, %v1281, %v1326
        %vm1329 = vcmask 1043459
        %v1330 = vsel %vm1329, %v1288, %v1328
        %vm1331 = vcmask 1044484
        %v1332 = vsel %vm1331, %v1295, %v1330
        %vm1333 = vcmask 1045509
        %v1334 = vsel %vm1333, %v1302, %v1332
        %vm1335 = vcmask 1046534
        %v1336 = vsel %vm1335, %v1309, %v1334
        %vm1337 = vcmask 1047559
        %v1338 = vsel %vm1337, %v1316, %v1336
        %v1340 = vadd.f32 %v948, %v1338
        %1341 = vst.msk [vmem:[%s613] sm:$0xff] %vm642, %v1197
        %1342 = vst.msk [vmem:[%s613 + $0x8] sm:$0xff] %vm642, %v1198
        %1343 = vst.msk [vmem:[%s613 + $0x10] sm:$0xff] %vm642, %v1199
        %1344 = vst.msk [vmem:[%s613 + $0x18] sm:$0xff] %vm642, %v1200
        %1345 = vst.msk [vmem:[%s613 + $0x20] sm:$0xff] %vm642, %v1201
        %1346 = vst.msk [vmem:[%s613 + $0x28] sm:$0xff] %vm642, %v1202
        %1347 = vst.msk [vmem:[%s613 + $0x30] sm:$0xff] %vm642, %v1203
        %1348 = vst.msk [vmem:[%s613 + $0x38] sm:$0xff] %vm642, %v1204
        %1349 = vst.msk [vmem:[%s621] sm:$0xff] %vm642, %v1340
        %v1350 = vsel %vm642, %v1197, 0.0
        %v1351 = vsel %vm642, %v1198, 0.0
        %v1352 = vadd.f32 %v1350, %v1351
        %v1353 = vsel %vm642, %v1199, 0.0
        %v1354 = vadd.f32 %v1352, %v1353
        %v1355 = vsel %vm642, %v1200, 0.0
        %v1356 = vadd.f32 %v1354, %v1355
        %v1357 = vsel %vm642, %v1201, 0.0
        %v1358 = vadd.f32 %v1356, %v1357
        %v1359 = vsel %vm642, %v1202, 0.0
        %v1360 = vadd.f32 %v1358, %v1359
        %v1361 = vsel %vm642, %v1203, 0.0
        %v1362 = vadd.f32 %v1360, %v1361
        %v1363 = vsel %vm642, %v1204, 0.0
        %v1364 = vadd.f32 %v1362, %v1363
        %v1365 = vrot.slane %v1364, 4
        %v1366 = vadd.f32 %v1364, %v1365
        %v1367 = vrot.slane %v1366, 2
        %v1368 = vadd.f32 %v1366, %v1367
        %v1369 = vrot.slane %v1368, 1
        %v1370 = vadd.f32 %v1368, %v1369
        %v1371 = vmul.f32 %v1197, %v1197
        %v1372 = vmul.f32 %v1198, %v1198
        %v1373 = vmul.f32 %v1199, %v1199
        %v1374 = vmul.f32 %v1200, %v1200
        %v1375 = vmul.f32 %v1201, %v1201
        %v1376 = vmul.f32 %v1202, %v1202
        %v1377 = vmul.f32 %v1203, %v1203
        %v1378 = vmul.f32 %v1204, %v1204
        %v1379 = vsel %vm642, %v1371, 0.0
        %v1380 = vsel %vm642, %v1372, 0.0
        %v1381 = vadd.f32 %v1379, %v1380
        %v1382 = vsel %vm642, %v1373, 0.0
        %v1383 = vadd.f32 %v1381, %v1382
        %v1384 = vsel %vm642, %v1374, 0.0
        %v1385 = vadd.f32 %v1383, %v1384
        %v1386 = vsel %vm642, %v1375, 0.0
        %v1387 = vadd.f32 %v1385, %v1386
        %v1388 = vsel %vm642, %v1376, 0.0
        %v1389 = vadd.f32 %v1387, %v1388
        %v1390 = vsel %vm642, %v1377, 0.0
        %v1391 = vadd.f32 %v1389, %v1390
        %v1392 = vsel %vm642, %v1378, 0.0
        %v1393 = vadd.f32 %v1391, %v1392
        %v1394 = vrot.slane %v1393, 4
        %v1395 = vadd.f32 %v1393, %v1394
        %v1396 = vrot.slane %v1395, 2
        %v1397 = vadd.f32 %v1395, %v1396
        %v1398 = vrot.slane %v1397, 1
        %v1399 = vadd.f32 %v1397, %v1398
        %v1400 = vsel %vm642, %v1340, 0.0
        %v1401 = vrot.slane %v1400, 4
        %v1402 = vadd.f32 %v1400, %v1401
        %v1403 = vrot.slane %v1402, 2
        %v1404 = vadd.f32 %v1402, %v1403
        %v1405 = vrot.slane %v1404, 1
        %v1406 = vadd.f32 %v1404, %v1405
        %v1407 = vmul.f32 %v1340, %v1340
        %v1408 = vsel %vm642, %v1407, 0.0
        %v1409 = vrot.slane %v1408, 4
        %v1410 = vadd.f32 %v1408, %v1409
        %v1411 = vrot.slane %v1410, 2
        %v1412 = vadd.f32 %v1410, %v1411
        %v1413 = vrot.slane %v1412, 1
        %v1414 = vadd.f32 %v1412, %v1413
        %vm1415 = vcmask 1040384
        %v1416 = vsel %vm1415, %v1370, %v1399
        %vm1417 = vcmask 1041408
        %v1418 = vsel %vm1417, %v1416, %v1406
        %vm1419 = vcmask 1042432
        %v1420 = vsel %vm1419, %v1418, %v1414
        %vm1421 = vcmask 257024
        %1422 = vst.msk [vmem:[%s628] sm:$0xf] %vm1421, %v1420
        %s1423 = smul.u32 8, %s35
        %p1424 = scmp.lt.s32.totalorder %s34, 1
        %s1425 = scalar_select %p1424, %s34, 1
        %p1426 = scmp.lt.s32.totalorder %s1423, 7
        %s1427 = scalar_select %p1426, %s1423, 7
        %s1428 = smul.addr %s1425, 8
        %s1429 = sadd.s32 %s1427, %s1428
        %s1430 = smul.addr %s1429, 8
        %s1431 = scalar_lea.vmem %s11, %s1430
        %p1432 = scmp.lt.s32.totalorder %s34, 1
        %s1433 = scalar_select %p1432, %s34, 1
        %p1434 = scmp.lt.s32.totalorder %s35, 0
        %s1435 = scalar_select %p1434, %s35, 0
        %s1436 = sadd.s32 %s1435, %s1433
        %s1437 = smul.addr %s1436, 8
        %s1438 = scalar_lea.vmem %s12, %s1437
        %p1439 = scmp.lt.s32.totalorder %s34, 1
        %s1440 = scalar_select %p1439, %s34, 1
        %p1441 = scmp.lt.s32.totalorder %s35, 0
        %s1442 = scalar_select %p1441, %s35, 0
        %s1443 = sadd.s32 %s1442, %s1440
        %s1444 = smul.addr %s1443, 4
        %s1445 = scalar_lea.vmem %s13, %s1444
        // Predicated region
        $region85: #{residual_gated_gcn_layer.3} parent=63 // pred_check
          %p1446 = pneg %p312
        $region86: #{residual_gated_gcn_layer.3} parent=63 // pred_check_branch
          %1448 = sbr.rel (%p1446) target = $region88
        $region87: #{residual_gated_gcn_layer.3} parent=63 // pred_region
          %s1449 = smul.u32 8, %s35
        $region88: #{residual_gated_gcn_layer.3} parent=63 // pred_fallthru
          _
        // Predicated region
        $region89: #{residual_gated_gcn_layer.3} parent=63 // pred_check
          %p1450 = pneg %p340
        $region90: #{residual_gated_gcn_layer.3} parent=63 // pred_check_branch
          %1452 = sbr.rel (%p1450) target = $region92
        $region91: #{residual_gated_gcn_layer.3} parent=63 // pred_region
          _
        $region92: #{residual_gated_gcn_layer.3} parent=63 // pred_fallthru
          _
        // Predicated region
        $region93: #{residual_gated_gcn_layer.3} parent=63 // pred_check
          %p1453 = pneg %p368
        $region94: #{residual_gated_gcn_layer.3} parent=63 // pred_check_branch
          %1455 = sbr.rel (%p1453) target = $region96
        $region95: #{residual_gated_gcn_layer.3} parent=63 // pred_region
          _
        $region96: #{residual_gated_gcn_layer.3} parent=63 // pred_fallthru
          _
      $region64: #{residual_gated_gcn_layer.3} parent=5 // pred_fallthru
        _
      %p1456 = scmp.le.s32.totalorder 2, %s25
      // Predicated region
      $region97: #{residual_gated_gcn_layer.3} parent=5 // pred_check
        %p1457 = pneg %p1456
      $region98: #{residual_gated_gcn_layer.3} parent=5 // pred_check_branch
        %1459 = sbr.rel (%p1457) target = $region100
      $region99: #{residual_gated_gcn_layer.3} parent=5 // pred_region
        %s1460 = ssub.s32 %s25, 2
        // Predicated region
        $region101: #{residual_gated_gcn_layer.3} parent=99 // pred_check
          %p1461 = pneg %p318
        $region102: #{residual_gated_gcn_layer.3} parent=99 // pred_check_branch
          %1463 = sbr.rel (%p1461) target = $region104
        $region103: #{residual_gated_gcn_layer.3} parent=99 // pred_region
          %s1464 = smul.u32 8, %s37
          %p1465 = scmp.lt.s32.totalorder %s36, 1
          %s1466 = scalar_select %p1465, %s36, 1
          %p1467 = scmp.lt.s32.totalorder %s1464, 7
          %s1468 = scalar_select %p1467, %s1464, 7
          %s1469 = smul.addr %s1466, 8
          %s1470 = sadd.s32 %s1468, %s1469
          %s1471 = smul.addr %s1470, 8
          %s1472 = scalar_lea.vmem %s11, %s1471
        $region104: #{residual_gated_gcn_layer.3} parent=99 // pred_fallthru
          _
        // Predicated region
        $region105: #{residual_gated_gcn_layer.3} parent=99 // pred_check
          %p1473 = pneg %p346
        $region106: #{residual_gated_gcn_layer.3} parent=99 // pred_check_branch
          %1475 = sbr.rel (%p1473) target = $region108
        $region107: #{residual_gated_gcn_layer.3} parent=99 // pred_region
          %p1476 = scmp.lt.s32.totalorder %s36, 1
          %s1477 = scalar_select %p1476, %s36, 1
          %p1478 = scmp.lt.s32.totalorder %s37, 0
          %s1479 = scalar_select %p1478, %s37, 0
          %s1480 = sadd.s32 %s1479, %s1477
          %s1481 = smul.addr %s1480, 8
          %s1482 = scalar_lea.vmem %s12, %s1481
        $region108: #{residual_gated_gcn_layer.3} parent=99 // pred_fallthru
          _
        // Predicated region
        $region109: #{residual_gated_gcn_layer.3} parent=99 // pred_check
          %p1483 = pneg %p374
        $region110: #{residual_gated_gcn_layer.3} parent=99 // pred_check_branch
          %1485 = sbr.rel (%p1483) target = $region112
        $region111: #{residual_gated_gcn_layer.3} parent=99 // pred_region
          %p1486 = scmp.lt.s32.totalorder %s36, 1
          %s1487 = scalar_select %p1486, %s36, 1
          %p1488 = scmp.lt.s32.totalorder %s37, 0
          %s1489 = scalar_select %p1488, %s37, 0
          %s1490 = sadd.s32 %s1489, %s1487
          %s1491 = smul.addr %s1490, 4
          %s1492 = scalar_lea.vmem %s13, %s1491
        $region112: #{residual_gated_gcn_layer.3} parent=99 // pred_fallthru
          _
      $region100: #{residual_gated_gcn_layer.3} parent=5 // pred_fallthru
        _
    $region6: #{residual_gated_gcn_layer.3} parent=1 // loop_footer
      %s29 = sadd.s32 1, %s25
    $region7: #{residual_gated_gcn_layer.3} parent=1 // loop_footer_branch
      %24 = sbr.rel target = $region3
    $region8: #{residual_gated_gcn_layer.3} parent=1 // loop_exit
      _
    %1493 = vsyncpa [#allocation3], 1
    %s1494 = scalar_lea.sflag [#allocation3], 1
    %1495 = vsyncpa %s1494, 1
    %1496 = vsyncpa [#allocation5], 1
    %1497 = vsyncpa [#allocation8], 1

</llo_original>
